<compile_context>
chip_gen: v6e
topology: v6e:2x2x1
jax: 0.10.0
libtpu: 0.0.40
codegen_flags: <defaults>
</compile_context>

<pallas_src>
import jax
import jax.numpy as jnp
from jax import lax
from jax.experimental import pallas as pl
from jax.experimental.pallas import tpu as pltpu


def make_lstm_fc_kernel(seq: int, bp: int):
    """Builds the kernel closure with static seq length and padded batch."""

    def lstm_fc_kernel(x_ref, wih_ref, whh_ref, b_ref, wfc_ref, bfc_ref,
                       out_ref, gx_scr):
        """Full LSTM recurrence + final Linear, single grid point.

        x_ref   : (seq*bp, input_size)  VMEM  bf16   (seq-major, batch-padded)
        wih_ref : (input_size, 4*Hp)    VMEM  bf16   (W_ih^T, gate-padded)
        whh_ref : (Hp, 4*Hp)            VMEM  bf16   (W_hh^T, gate/row-padded)
        b_ref   : (1, 4*Hp)             VMEM  f32    (b_ih + b_hh, gate-padded)
        wfc_ref : (Hp, 2)               VMEM  f32    (W_fc^T, row-padded)
        bfc_ref : (1, 2)                VMEM  f32
        out_ref : (batch, 2)            VMEM  f32
        gx_scr  : (seq*bp, 4*Hp)        VMEM  f32 scratch (hoisted projection)
        """
        four_hp = gx_scr.shape[1]
        hp = four_hp // 4
        batch = out_ref.shape[0]

        # ---- Hoisted input projection: one MXU matmul, bias folded in ------
        gx_scr[...] = (
            jnp.dot(x_ref[...], wih_ref[...],
                    preferred_element_type=jnp.float32)
            + b_ref[...])

        # ---- Recurrence (fully unrolled; only h @ W_hh is serialized) ------
        h = jnp.zeros((bp, hp), jnp.float32)
        c = jnp.zeros((bp, hp), jnp.float32)
        for t in range(seq):
            # Static, sublane-aligned slice (t*bp is a multiple of 8).
            gates = (gx_scr[pl.ds(t * bp, bp), :]
                     + jnp.dot(h.astype(whh_ref.dtype), whh_ref[...],
                               preferred_element_type=jnp.float32))
            # Lane-tile-aligned (multiples of 128) gate slices: i, f, g, o.
            i_g = jax.nn.sigmoid(gates[:, 0 * hp:1 * hp])
            f_g = jax.nn.sigmoid(gates[:, 1 * hp:2 * hp])
            g_g = jnp.tanh(gates[:, 2 * hp:3 * hp])
            o_g = jax.nn.sigmoid(gates[:, 3 * hp:4 * hp])
            c = f_g * c + i_g * g_g
            h = o_g * jnp.tanh(c)

        # ---- Final Linear on h_T (one tiny matmul, outside the loop) -------
        logits = (jnp.dot(h, wfc_ref[...], preferred_element_type=jnp.float32)
                  + bfc_ref[...])
        out_ref[...] = logits[:batch, :].astype(out_ref.dtype)

    return lstm_fc_kernel


def violence_rnn_forward(x, params):
    """x: (batch, seq, input_size) float32, returns (batch, 2) float32."""
    batch, seq, input_size = x.shape
    hidden = params["w_hh"].shape[1]               # w_hh: (4H, H)
    hp = max(((hidden + 127) // 128) * 128, 128)   # lane-tile-aligned gates
    bp = max(((batch + 7) // 8) * 8, 8)            # sublane-aligned batch

    def pack_gates(w_t, rows_pad=None):
        """(K, 4*hidden) -> (rows_pad or K, 4*hp): each gate block lane-aligned,
        padded columns/rows are exactly zero."""
        k = w_t.shape[0]
        out = jnp.zeros((k, 4, hp), w_t.dtype)
        out = out.at[:, :, :hidden].set(w_t.reshape(k, 4, hidden))
        out = out.reshape(k, 4 * hp)
        if rows_pad is not None and rows_pad > k:
            out = jnp.pad(out, ((0, rows_pad - k), (0, 0)))
        return out

    # Weight prep (glue, plain JAX). MXU operands in bf16; biases / fc in f32.
    wih_p = pack_gates(params["w_ih"].T).astype(jnp.bfloat16)               # (in, 4Hp)
    whh_p = pack_gates(params["w_hh"].T, rows_pad=hp).astype(jnp.bfloat16)  # (Hp, 4Hp)
    b_p = pack_gates((params["b_ih"] + params["b_hh"]).reshape(1, -1))      # (1, 4Hp) f32
    wfc_p = jnp.zeros((hp, 2), jnp.float32).at[:hidden, :].set(params["w_fc"].T)
    bfc = params["b_fc"].reshape(1, 2).astype(jnp.float32)

    # seq-major, batch-padded, flattened, bf16 — one small fused XLA copy of x.
    # For large x, have the producer emit seq-major (or stream via a seq grid).
    x_sm = jnp.transpose(x, (1, 0, 2))                        # (seq, batch, in)
    x_sm = jnp.pad(x_sm, ((0, 0), (0, bp - batch), (0, 0)))   # (seq, bp, in)
    x2d = x_sm.reshape(seq * bp, input_size).astype(jnp.bfloat16)

    vmem = pl.BlockSpec(memory_space=pltpu.MemorySpace.VMEM)
    out = pl.pallas_call(
        make_lstm_fc_kernel(seq, bp),
        out_shape=jax.ShapeDtypeStruct((batch, 2), jnp.float32),
        in_specs=[vmem] * 6,
        out_specs=vmem,
        scratch_shapes=[
            pltpu.VMEM((seq * bp, 4 * hp), jnp.float32),   # hoisted gates_x
        ],
    )(x2d, wih_p, whh_p, b_p, wfc_p, bfc)
    return out


def _reference_forward(x, params, mxu_dtype=jnp.float32):
    """Pure-JAX reference of the PyTorch forward.

    mxu_dtype=float32  -> exact PyTorch-style f32 math.
    mxu_dtype=bfloat16 -> same bf16-operand / f32-accumulate scheme as the
                          kernel (isolates kernel bugs from quantization).
    """
    hidden = params["w_hh"].shape[1]
    cast = lambda a: a.astype(mxu_dtype)
    wih_t = cast(params["w_ih"].T)
    whh_t = cast(params["w_hh"].T)
    b = (params["b_ih"] + params["b_hh"]).astype(jnp.float32)

    def cell(carry, x_t):
        h, c = carry
        gates = (jnp.dot(cast(x_t), wih_t, preferred_element_type=jnp.float32)
                 + jnp.dot(cast(h), whh_t, preferred_element_type=jnp.float32)
                 + b)
        i_g = jax.nn.sigmoid(gates[:, 0 * hidden:1 * hidden])
        f_g = jax.nn.sigmoid(gates[:, 1 * hidden:2 * hidden])
        g_g = jnp.tanh(gates[:, 2 * hidden:3 * hidden])
        o_g = jax.nn.sigmoid(gates[:, 3 * hidden:4 * hidden])
        c_new = f_g * c + i_g * g_g
        h_new = o_g * jnp.tanh(c_new)
        return (h_new, c_new), None

    batch = x.shape[0]
    h0 = jnp.zeros((batch, hidden), jnp.float32)
    c0 = jnp.zeros((batch, hidden), jnp.float32)
    (h_last, _), _ = lax.scan(cell, (h0, c0), jnp.transpose(x, (1, 0, 2)))
    return h_last @ params["w_fc"].T + params["b_fc"]


def init_params(key, input_size, hidden_size):
    """Deterministic init matching PyTorch LSTM/Linear parameter shapes."""
    ks = jax.random.split(key, 6)
    bound = 1.0 / jnp.sqrt(hidden_size)
    u = lambda k, shape: jax.random.uniform(k, shape, jnp.float32, -bound, bound)
    return {
        "w_ih": u(ks[0], (4 * hidden_size, input_size)),
        "w_hh": u(ks[1], (4 * hidden_size, hidden_size)),
        "b_ih": u(ks[2], (4 * hidden_size,)),
        "b_hh": u(ks[3], (4 * hidden_size,)),
        "w_fc": u(ks[4], (2, hidden_size)),
        "b_fc": u(ks[5], (2,)),
    }


if __name__ == "__main__":
    batch, seq, input_size, hidden_size = 2, 8, 16, 32

    key = jax.random.PRNGKey(0)
    k_x, k_p = jax.random.split(key)
    x = jax.random.normal(k_x, (batch, seq, input_size), jnp.float32)
    params = init_params(k_p, input_size, hidden_size)

    out = violence_rnn_forward(x, params)
    out = jax.block_until_ready(out)
    assert out.shape == (batch, 2)

    # Tight check vs. a reference using the same bf16-operand / f32-accumulate
    # scheme as the kernel (catches real kernel bugs).
    ref_q = _reference_forward(x, params, mxu_dtype=jnp.bfloat16)
    assert jnp.allclose(out, ref_q, rtol=2e-3, atol=2e-3), (out, ref_q)

    # Looser check vs. the exact f32 PyTorch-equivalent forward; the gap is
    # bounded by bf16 operand quantization of the MXU inputs.
    ref_f32 = _reference_forward(x, params)
    assert jnp.allclose(out, ref_f32, rtol=2e-2, atol=2e-2), (out, ref_f32)

    print("KERNEL_OK")
</pallas_src>

<mosaic_0001>
module attributes {stable_mosaic.version = 11 : i64} {
  func.func @lstm_fc_kernel(%arg0: memref<64x16xbf16, #tpu.memory_space<vmem>>, %arg1: memref<16x512xbf16, #tpu.memory_space<vmem>>, %arg2: memref<128x512xbf16, #tpu.memory_space<vmem>>, %arg3: memref<1x512xf32, #tpu.memory_space<vmem>>, %arg4: memref<128x2xf32, #tpu.memory_space<vmem>>, %arg5: memref<1x2xf32, #tpu.memory_space<vmem>>, %arg6: memref<2x2xf32, #tpu.memory_space<vmem>>, %arg7: memref<64x512xf32, #tpu.memory_space<vmem>>) attributes {dimension_semantics = [], scalar_prefetch = 0 : i64, scratch_operands = 1 : i64, tpu.core_type = #tpu.core_type<tc>} {
    %c0 = arith.constant 0 : index
    %c0_0 = arith.constant 0 : index
    %0 = vector.load %arg0[%c0, %c0_0] : memref<64x16xbf16, #tpu.memory_space<vmem>>, vector<64x16xbf16>
    %c0_1 = arith.constant 0 : index
    %c0_2 = arith.constant 0 : index
    %1 = vector.load %arg1[%c0_1, %c0_2] : memref<16x512xbf16, #tpu.memory_space<vmem>>, vector<16x512xbf16>
    %cst = arith.constant dense<0.000000e+00> : vector<64x512xf32>
    %2 = tpu.matmul %0, %1, %cst {dimension_numbers = #tpu.dot_dimension_numbers<[1], [0], [0], [1], [0, 0, 1, 1], [], []>} : vector<64x16xbf16>, vector<16x512xbf16>, vector<64x512xf32> -> vector<64x512xf32>
    %c0_3 = arith.constant 0 : index
    %c0_4 = arith.constant 0 : index
    %3 = vector.load %arg3[%c0_3, %c0_4] : memref<1x512xf32, #tpu.memory_space<vmem>>, vector<1x512xf32>
    %4 = vector.broadcast %3 : vector<1x512xf32> to vector<64x512xf32>
    %5 = arith.addf %2, %4 : vector<64x512xf32>
    %c0_5 = arith.constant 0 : index
    %c0_6 = arith.constant 0 : index
    %6 = vector.load %arg7[%c0_5, %c0_6] : memref<64x512xf32, #tpu.memory_space<vmem>>, vector<64x512xf32>
    tpu.vector_store %arg7[%c0_5, %c0_6], %5 {strides = array<i32>} : memref<64x512xf32, #tpu.memory_space<vmem>>, vector<64x512xf32>,
    %cst_7 = arith.constant 0.000000e+00 : f32
    %7 = vector.broadcast %cst_7 : f32 to vector<8x128xf32>
    %cst_8 = arith.constant 0.000000e+00 : f32
    %8 = vector.broadcast %cst_8 : f32 to vector<8x128xf32>
    %c0_9 = arith.constant 0 : index
    %c0_10 = arith.constant 0 : index
    %9 = vector.load %arg7[%c0_9, %c0_10] : memref<64x512xf32, #tpu.memory_space<vmem>>, vector<8x512xf32>
    %10 = arith.truncf %7 : vector<8x128xf32> to vector<8x128xbf16>
    %c0_11 = arith.constant 0 : index
    %c0_12 = arith.constant 0 : index
    %11 = vector.load %arg2[%c0_11, %c0_12] : memref<128x512xbf16, #tpu.memory_space<vmem>>, vector<128x512xbf16>
    %cst_13 = arith.constant dense<0.000000e+00> : vector<8x512xf32>
    %12 = tpu.matmul %10, %11, %cst_13 {dimension_numbers = #tpu.dot_dimension_numbers<[1], [0], [0], [1], [0, 0, 1, 1], [], []>} : vector<8x128xbf16>, vector<128x512xbf16>, vector<8x512xf32> -> vector<8x512xf32>
    %13 = arith.addf %9, %12 : vector<8x512xf32>
    %14 = vector.extract_strided_slice %13 {offsets = [0, 0], sizes = [8, 128], strides = [1, 1]} : vector<8x512xf32> to vector<8x128xf32>
    %15 = arith.negf %14 : vector<8x128xf32>
    %16 = math.exp %15 : vector<8x128xf32>
    %cst_14 = arith.constant 1.000000e+00 : f32
    %17 = vector.broadcast %cst_14 : f32 to vector<8x128xf32>
    %18 = arith.addf %17, %16 : vector<8x128xf32>
    %19 = arith.divf %17, %18 : vector<8x128xf32>
    %20 = vector.extract_strided_slice %13 {offsets = [0, 128], sizes = [8, 128], strides = [1, 1]} : vector<8x512xf32> to vector<8x128xf32>
    %21 = arith.negf %20 : vector<8x128xf32>
    %22 = math.exp %21 : vector<8x128xf32>
    %cst_15 = arith.constant 1.000000e+00 : f32
    %23 = vector.broadcast %cst_15 : f32 to vector<8x128xf32>
    %24 = arith.addf %23, %22 : vector<8x128xf32>
    %25 = arith.divf %23, %24 : vector<8x128xf32>
    %26 = vector.extract_strided_slice %13 {offsets = [0, 256], sizes = [8, 128], strides = [1, 1]} : vector<8x512xf32> to vector<8x128xf32>
    %27 = math.tanh %26 : vector<8x128xf32>
    %28 = vector.extract_strided_slice %13 {offsets = [0, 384], sizes = [8, 128], strides = [1, 1]} : vector<8x512xf32> to vector<8x128xf32>
    %29 = arith.negf %28 : vector<8x128xf32>
    %30 = math.exp %29 : vector<8x128xf32>
    %cst_16 = arith.constant 1.000000e+00 : f32
    %31 = vector.broadcast %cst_16 : f32 to vector<8x128xf32>
    %32 = arith.addf %31, %30 : vector<8x128xf32>
    %33 = arith.divf %31, %32 : vector<8x128xf32>
    %34 = arith.mulf %25, %8 : vector<8x128xf32>
    %35 = arith.mulf %19, %27 : vector<8x128xf32>
    %36 = arith.addf %34, %35 : vector<8x128xf32>
    %37 = math.tanh %36 : vector<8x128xf32>
    %38 = arith.mulf %33, %37 : vector<8x128xf32>
    %c8 = arith.constant 8 : index
    %c0_17 = arith.constant 0 : index
    %39 = vector.load %arg7[%c8, %c0_17] : memref<64x512xf32, #tpu.memory_space<vmem>>, vector<8x512xf32>
    %40 = arith.truncf %38 : vector<8x128xf32> to vector<8x128xbf16>
    %c0_18 = arith.constant 0 : index
    %c0_19 = arith.constant 0 : index
    %41 = vector.load %arg2[%c0_18, %c0_19] : memref<128x512xbf16, #tpu.memory_space<vmem>>, vector<128x512xbf16>
    %cst_20 = arith.constant dense<0.000000e+00> : vector<8x512xf32>
    %42 = tpu.matmul %40, %41, %cst_20 {dimension_numbers = #tpu.dot_dimension_numbers<[1], [0], [0], [1], [0, 0, 1, 1], [], []>} : vector<8x128xbf16>, vector<128x512xbf16>, vector<8x512xf32> -> vector<8x512xf32>
    %43 = arith.addf %39, %42 : vector<8x512xf32>
    %44 = vector.extract_strided_slice %43 {offsets = [0, 0], sizes = [8, 128], strides = [1, 1]} : vector<8x512xf32> to vector<8x128xf32>
    %45 = arith.negf %44 : vector<8x128xf32>
    %46 = math.exp %45 : vector<8x128xf32>
    %cst_21 = arith.constant 1.000000e+00 : f32
    %47 = vector.broadcast %cst_21 : f32 to vector<8x128xf32>
    %48 = arith.addf %47, %46 : vector<8x128xf32>
    %49 = arith.divf %47, %48 : vector<8x128xf32>
    %50 = vector.extract_strided_slice %43 {offsets = [0, 128], sizes = [8, 128], strides = [1, 1]} : vector<8x512xf32> to vector<8x128xf32>
    %51 = arith.negf %50 : vector<8x128xf32>
    %52 = math.exp %51 : vector<8x128xf32>
    %cst_22 = arith.constant 1.000000e+00 : f32
    %53 = vector.broadcast %cst_22 : f32 to vector<8x128xf32>
    %54 = arith.addf %53, %52 : vector<8x128xf32>
    %55 = arith.divf %53, %54 : vector<8x128xf32>
    %56 = vector.extract_strided_slice %43 {offsets = [0, 256], sizes = [8, 128], strides = [1, 1]} : vector<8x512xf32> to vector<8x128xf32>
    %57 = math.tanh %56 : vector<8x128xf32>
    %58 = vector.extract_strided_slice %43 {offsets = [0, 384], sizes = [8, 128], strides = [1, 1]} : vector<8x512xf32> to vector<8x128xf32>
    %59 = arith.negf %58 : vector<8x128xf32>
    %60 = math.exp %59 : vector<8x128xf32>
    %cst_23 = arith.constant 1.000000e+00 : f32
    %61 = vector.broadcast %cst_23 : f32 to vector<8x128xf32>
    %62 = arith.addf %61, %60 : vector<8x128xf32>
    %63 = arith.divf %61, %62 : vector<8x128xf32>
    %64 = arith.mulf %55, %36 : vector<8x128xf32>
    %65 = arith.mulf %49, %57 : vector<8x128xf32>
    %66 = arith.addf %64, %65 : vector<8x128xf32>
    %67 = math.tanh %66 : vector<8x128xf32>
    %68 = arith.mulf %63, %67 : vector<8x128xf32>
    %c16 = arith.constant 16 : index
    %c0_24 = arith.constant 0 : index
    %69 = vector.load %arg7[%c16, %c0_24] : memref<64x512xf32, #tpu.memory_space<vmem>>, vector<8x512xf32>
    %70 = arith.truncf %68 : vector<8x128xf32> to vector<8x128xbf16>
    %c0_25 = arith.constant 0 : index
    %c0_26 = arith.constant 0 : index
    %71 = vector.load %arg2[%c0_25, %c0_26] : memref<128x512xbf16, #tpu.memory_space<vmem>>, vector<128x512xbf16>
    %cst_27 = arith.constant dense<0.000000e+00> : vector<8x512xf32>
    %72 = tpu.matmul %70, %71, %cst_27 {dimension_numbers = #tpu.dot_dimension_numbers<[1], [0], [0], [1], [0, 0, 1, 1], [], []>} : vector<8x128xbf16>, vector<128x512xbf16>, vector<8x512xf32> -> vector<8x512xf32>
    %73 = arith.addf %69, %72 : vector<8x512xf32>
    %74 = vector.extract_strided_slice %73 {offsets = [0, 0], sizes = [8, 128], strides = [1, 1]} : vector<8x512xf32> to vector<8x128xf32>
    %75 = arith.negf %74 : vector<8x128xf32>
    %76 = math.exp %75 : vector<8x128xf32>
    %cst_28 = arith.constant 1.000000e+00 : f32
    %77 = vector.broadcast %cst_28 : f32 to vector<8x128xf32>
    %78 = arith.addf %77, %76 : vector<8x128xf32>
    %79 = arith.divf %77, %78 : vector<8x128xf32>
    %80 = vector.extract_strided_slice %73 {offsets = [0, 128], sizes = [8, 128], strides = [1, 1]} : vector<8x512xf32> to vector<8x128xf32>
    %81 = arith.negf %80 : vector<8x128xf32>
    %82 = math.exp %81 : vector<8x128xf32>
    %cst_29 = arith.constant 1.000000e+00 : f32
    %83 = vector.broadcast %cst_29 : f32 to vector<8x128xf32>
    %84 = arith.addf %83, %82 : vector<8x128xf32>
    %85 = arith.divf %83, %84 : vector<8x128xf32>
    %86 = vector.extract_strided_slice %73 {offsets = [0, 256], sizes = [8, 128], strides = [1, 1]} : vector<8x512xf32> to vector<8x128xf32>
    %87 = math.tanh %86 : vector<8x128xf32>
    %88 = vector.extract_strided_slice %73 {offsets = [0, 384], sizes = [8, 128], strides = [1, 1]} : vector<8x512xf32> to vector<8x128xf32>
    %89 = arith.negf %88 : vector<8x128xf32>
    %90 = math.exp %89 : vector<8x128xf32>
    %cst_30 = arith.constant 1.000000e+00 : f32
    %91 = vector.broadcast %cst_30 : f32 to vector<8x128xf32>
    %92 = arith.addf %91, %90 : vector<8x128xf32>
    %93 = arith.divf %91, %92 : vector<8x128xf32>
    %94 = arith.mulf %85, %66 : vector<8x128xf32>
    %95 = arith.mulf %79, %87 : vector<8x128xf32>
    %96 = arith.addf %94, %95 : vector<8x128xf32>
    %97 = math.tanh %96 : vector<8x128xf32>
    %98 = arith.mulf %93, %97 : vector<8x128xf32>
    %c24 = arith.constant 24 : index
    %c0_31 = arith.constant 0 : index
    %99 = vector.load %arg7[%c24, %c0_31] : memref<64x512xf32, #tpu.memory_space<vmem>>, vector<8x512xf32>
    %100 = arith.truncf %98 : vector<8x128xf32> to vector<8x128xbf16>
    %c0_32 = arith.constant 0 : index
    %c0_33 = arith.constant 0 : index
    %101 = vector.load %arg2[%c0_32, %c0_33] : memref<128x512xbf16, #tpu.memory_space<vmem>>, vector<128x512xbf16>
    %cst_34 = arith.constant dense<0.000000e+00> : vector<8x512xf32>
    %102 = tpu.matmul %100, %101, %cst_34 {dimension_numbers = #tpu.dot_dimension_numbers<[1], [0], [0], [1], [0, 0, 1, 1], [], []>} : vector<8x128xbf16>, vector<128x512xbf16>, vector<8x512xf32> -> vector<8x512xf32>
    %103 = arith.addf %99, %102 : vector<8x512xf32>
    %104 = vector.extract_strided_slice %103 {offsets = [0, 0], sizes = [8, 128], strides = [1, 1]} : vector<8x512xf32> to vector<8x128xf32>
    %105 = arith.negf %104 : vector<8x128xf32>
    %106 = math.exp %105 : vector<8x128xf32>
    %cst_35 = arith.constant 1.000000e+00 : f32
    %107 = vector.broadcast %cst_35 : f32 to vector<8x128xf32>
    %108 = arith.addf %107, %106 : vector<8x128xf32>
    %109 = arith.divf %107, %108 : vector<8x128xf32>
    %110 = vector.extract_strided_slice %103 {offsets = [0, 128], sizes = [8, 128], strides = [1, 1]} : vector<8x512xf32> to vector<8x128xf32>
    %111 = arith.negf %110 : vector<8x128xf32>
    %112 = math.exp %111 : vector<8x128xf32>
    %cst_36 = arith.constant 1.000000e+00 : f32
    %113 = vector.broadcast %cst_36 : f32 to vector<8x128xf32>
    %114 = arith.addf %113, %112 : vector<8x128xf32>
    %115 = arith.divf %113, %114 : vector<8x128xf32>
    %116 = vector.extract_strided_slice %103 {offsets = [0, 256], sizes = [8, 128], strides = [1, 1]} : vector<8x512xf32> to vector<8x128xf32>
    %117 = math.tanh %116 : vector<8x128xf32>
    %118 = vector.extract_strided_slice %103 {offsets = [0, 384], sizes = [8, 128], strides = [1, 1]} : vector<8x512xf32> to vector<8x128xf32>
    %119 = arith.negf %118 : vector<8x128xf32>
    %120 = math.exp %119 : vector<8x128xf32>
    %cst_37 = arith.constant 1.000000e+00 : f32
    %121 = vector.broadcast %cst_37 : f32 to vector<8x128xf32>
    %122 = arith.addf %121, %120 : vector<8x128xf32>
    %123 = arith.divf %121, %122 : vector<8x128xf32>
    %124 = arith.mulf %115, %96 : vector<8x128xf32>
    %125 = arith.mulf %109, %117 : vector<8x128xf32>
    %126 = arith.addf %124, %125 : vector<8x128xf32>
    %127 = math.tanh %126 : vector<8x128xf32>
    %128 = arith.mulf %123, %127 : vector<8x128xf32>
    %c32 = arith.constant 32 : index
    %c0_38 = arith.constant 0 : index
    %129 = vector.load %arg7[%c32, %c0_38] : memref<64x512xf32, #tpu.memory_space<vmem>>, vector<8x512xf32>
    %130 = arith.truncf %128 : vector<8x128xf32> to vector<8x128xbf16>
    %c0_39 = arith.constant 0 : index
    %c0_40 = arith.constant 0 : index
    %131 = vector.load %arg2[%c0_39, %c0_40] : memref<128x512xbf16, #tpu.memory_space<vmem>>, vector<128x512xbf16>
    %cst_41 = arith.constant dense<0.000000e+00> : vector<8x512xf32>
    %132 = tpu.matmul %130, %131, %cst_41 {dimension_numbers = #tpu.dot_dimension_numbers<[1], [0], [0], [1], [0, 0, 1, 1], [], []>} : vector<8x128xbf16>, vector<128x512xbf16>, vector<8x512xf32> -> vector<8x512xf32>
    %133 = arith.addf %129, %132 : vector<8x512xf32>
    %134 = vector.extract_strided_slice %133 {offsets = [0, 0], sizes = [8, 128], strides = [1, 1]} : vector<8x512xf32> to vector<8x128xf32>
    %135 = arith.negf %134 : vector<8x128xf32>
    %136 = math.exp %135 : vector<8x128xf32>
    %cst_42 = arith.constant 1.000000e+00 : f32
    %137 = vector.broadcast %cst_42 : f32 to vector<8x128xf32>
    %138 = arith.addf %137, %136 : vector<8x128xf32>
    %139 = arith.divf %137, %138 : vector<8x128xf32>
    %140 = vector.extract_strided_slice %133 {offsets = [0, 128], sizes = [8, 128], strides = [1, 1]} : vector<8x512xf32> to vector<8x128xf32>
    %141 = arith.negf %140 : vector<8x128xf32>
    %142 = math.exp %141 : vector<8x128xf32>
    %cst_43 = arith.constant 1.000000e+00 : f32
    %143 = vector.broadcast %cst_43 : f32 to vector<8x128xf32>
    %144 = arith.addf %143, %142 : vector<8x128xf32>
    %145 = arith.divf %143, %144 : vector<8x128xf32>
    %146 = vector.extract_strided_slice %133 {offsets = [0, 256], sizes = [8, 128], strides = [1, 1]} : vector<8x512xf32> to vector<8x128xf32>
    %147 = math.tanh %146 : vector<8x128xf32>
    %148 = vector.extract_strided_slice %133 {offsets = [0, 384], sizes = [8, 128], strides = [1, 1]} : vector<8x512xf32> to vector<8x128xf32>
    %149 = arith.negf %148 : vector<8x128xf32>
    %150 = math.exp %149 : vector<8x128xf32>
    %cst_44 = arith.constant 1.000000e+00 : f32
    %151 = vector.broadcast %cst_44 : f32 to vector<8x128xf32>
    %152 = arith.addf %151, %150 : vector<8x128xf32>
    %153 = arith.divf %151, %152 : vector<8x128xf32>
    %154 = arith.mulf %145, %126 : vector<8x128xf32>
    %155 = arith.mulf %139, %147 : vector<8x128xf32>
    %156 = arith.addf %154, %155 : vector<8x128xf32>
    %157 = math.tanh %156 : vector<8x128xf32>
    %158 = arith.mulf %153, %157 : vector<8x128xf32>
    %c40 = arith.constant 40 : index
    %c0_45 = arith.constant 0 : index
    %159 = vector.load %arg7[%c40, %c0_45] : memref<64x512xf32, #tpu.memory_space<vmem>>, vector<8x512xf32>
    %160 = arith.truncf %158 : vector<8x128xf32> to vector<8x128xbf16>
    %c0_46 = arith.constant 0 : index
    %c0_47 = arith.constant 0 : index
    %161 = vector.load %arg2[%c0_46, %c0_47] : memref<128x512xbf16, #tpu.memory_space<vmem>>, vector<128x512xbf16>
    %cst_48 = arith.constant dense<0.000000e+00> : vector<8x512xf32>
    %162 = tpu.matmul %160, %161, %cst_48 {dimension_numbers = #tpu.dot_dimension_numbers<[1], [0], [0], [1], [0, 0, 1, 1], [], []>} : vector<8x128xbf16>, vector<128x512xbf16>, vector<8x512xf32> -> vector<8x512xf32>
    %163 = arith.addf %159, %162 : vector<8x512xf32>
    %164 = vector.extract_strided_slice %163 {offsets = [0, 0], sizes = [8, 128], strides = [1, 1]} : vector<8x512xf32> to vector<8x128xf32>
    %165 = arith.negf %164 : vector<8x128xf32>
    %166 = math.exp %165 : vector<8x128xf32>
    %cst_49 = arith.constant 1.000000e+00 : f32
    %167 = vector.broadcast %cst_49 : f32 to vector<8x128xf32>
    %168 = arith.addf %167, %166 : vector<8x128xf32>
    %169 = arith.divf %167, %168 : vector<8x128xf32>
    %170 = vector.extract_strided_slice %163 {offsets = [0, 128], sizes = [8, 128], strides = [1, 1]} : vector<8x512xf32> to vector<8x128xf32>
    %171 = arith.negf %170 : vector<8x128xf32>
    %172 = math.exp %171 : vector<8x128xf32>
    %cst_50 = arith.constant 1.000000e+00 : f32
    %173 = vector.broadcast %cst_50 : f32 to vector<8x128xf32>
    %174 = arith.addf %173, %172 : vector<8x128xf32>
    %175 = arith.divf %173, %174 : vector<8x128xf32>
    %176 = vector.extract_strided_slice %163 {offsets = [0, 256], sizes = [8, 128], strides = [1, 1]} : vector<8x512xf32> to vector<8x128xf32>
    %177 = math.tanh %176 : vector<8x128xf32>
    %178 = vector.extract_strided_slice %163 {offsets = [0, 384], sizes = [8, 128], strides = [1, 1]} : vector<8x512xf32> to vector<8x128xf32>
    %179 = arith.negf %178 : vector<8x128xf32>
    %180 = math.exp %179 : vector<8x128xf32>
    %cst_51 = arith.constant 1.000000e+00 : f32
    %181 = vector.broadcast %cst_51 : f32 to vector<8x128xf32>
    %182 = arith.addf %181, %180 : vector<8x128xf32>
    %183 = arith.divf %181, %182 : vector<8x128xf32>
    %184 = arith.mulf %175, %156 : vector<8x128xf32>
    %185 = arith.mulf %169, %177 : vector<8x128xf32>
    %186 = arith.addf %184, %185 : vector<8x128xf32>
    %187 = math.tanh %186 : vector<8x128xf32>
    %188 = arith.mulf %183, %187 : vector<8x128xf32>
    %c48 = arith.constant 48 : index
    %c0_52 = arith.constant 0 : index
    %189 = vector.load %arg7[%c48, %c0_52] : memref<64x512xf32, #tpu.memory_space<vmem>>, vector<8x512xf32>
    %190 = arith.truncf %188 : vector<8x128xf32> to vector<8x128xbf16>
    %c0_53 = arith.constant 0 : index
    %c0_54 = arith.constant 0 : index
    %191 = vector.load %arg2[%c0_53, %c0_54] : memref<128x512xbf16, #tpu.memory_space<vmem>>, vector<128x512xbf16>
    %cst_55 = arith.constant dense<0.000000e+00> : vector<8x512xf32>
    %192 = tpu.matmul %190, %191, %cst_55 {dimension_numbers = #tpu.dot_dimension_numbers<[1], [0], [0], [1], [0, 0, 1, 1], [], []>} : vector<8x128xbf16>, vector<128x512xbf16>, vector<8x512xf32> -> vector<8x512xf32>
    %193 = arith.addf %189, %192 : vector<8x512xf32>
    %194 = vector.extract_strided_slice %193 {offsets = [0, 0], sizes = [8, 128], strides = [1, 1]} : vector<8x512xf32> to vector<8x128xf32>
    %195 = arith.negf %194 : vector<8x128xf32>
    %196 = math.exp %195 : vector<8x128xf32>
    %cst_56 = arith.constant 1.000000e+00 : f32
    %197 = vector.broadcast %cst_56 : f32 to vector<8x128xf32>
    %198 = arith.addf %197, %196 : vector<8x128xf32>
    %199 = arith.divf %197, %198 : vector<8x128xf32>
    %200 = vector.extract_strided_slice %193 {offsets = [0, 128], sizes = [8, 128], strides = [1, 1]} : vector<8x512xf32> to vector<8x128xf32>
    %201 = arith.negf %200 : vector<8x128xf32>
    %202 = math.exp %201 : vector<8x128xf32>
    %cst_57 = arith.constant 1.000000e+00 : f32
    %203 = vector.broadcast %cst_57 : f32 to vector<8x128xf32>
    %204 = arith.addf %203, %202 : vector<8x128xf32>
    %205 = arith.divf %203, %204 : vector<8x128xf32>
    %206 = vector.extract_strided_slice %193 {offsets = [0, 256], sizes = [8, 128], strides = [1, 1]} : vector<8x512xf32> to vector<8x128xf32>
    %207 = math.tanh %206 : vector<8x128xf32>
    %208 = vector.extract_strided_slice %193 {offsets = [0, 384], sizes = [8, 128], strides = [1, 1]} : vector<8x512xf32> to vector<8x128xf32>
    %209 = arith.negf %208 : vector<8x128xf32>
    %210 = math.exp %209 : vector<8x128xf32>
    %cst_58 = arith.constant 1.000000e+00 : f32
    %211 = vector.broadcast %cst_58 : f32 to vector<8x128xf32>
    %212 = arith.addf %211, %210 : vector<8x128xf32>
    %213 = arith.divf %211, %212 : vector<8x128xf32>
    %214 = arith.mulf %205, %186 : vector<8x128xf32>
    %215 = arith.mulf %199, %207 : vector<8x128xf32>
    %216 = arith.addf %214, %215 : vector<8x128xf32>
    %217 = math.tanh %216 : vector<8x128xf32>
    %218 = arith.mulf %213, %217 : vector<8x128xf32>
    %c56 = arith.constant 56 : index
    %c0_59 = arith.constant 0 : index
    %219 = vector.load %arg7[%c56, %c0_59] : memref<64x512xf32, #tpu.memory_space<vmem>>, vector<8x512xf32>
    %220 = arith.truncf %218 : vector<8x128xf32> to vector<8x128xbf16>
    %c0_60 = arith.constant 0 : index
    %c0_61 = arith.constant 0 : index
    %221 = vector.load %arg2[%c0_60, %c0_61] : memref<128x512xbf16, #tpu.memory_space<vmem>>, vector<128x512xbf16>
    %cst_62 = arith.constant dense<0.000000e+00> : vector<8x512xf32>
    %222 = tpu.matmul %220, %221, %cst_62 {dimension_numbers = #tpu.dot_dimension_numbers<[1], [0], [0], [1], [0, 0, 1, 1], [], []>} : vector<8x128xbf16>, vector<128x512xbf16>, vector<8x512xf32> -> vector<8x512xf32>
    %223 = arith.addf %219, %222 : vector<8x512xf32>
    %224 = vector.extract_strided_slice %223 {offsets = [0, 0], sizes = [8, 128], strides = [1, 1]} : vector<8x512xf32> to vector<8x128xf32>
    %225 = arith.negf %224 : vector<8x128xf32>
    %226 = math.exp %225 : vector<8x128xf32>
    %cst_63 = arith.constant 1.000000e+00 : f32
    %227 = vector.broadcast %cst_63 : f32 to vector<8x128xf32>
    %228 = arith.addf %227, %226 : vector<8x128xf32>
    %229 = arith.divf %227, %228 : vector<8x128xf32>
    %230 = vector.extract_strided_slice %223 {offsets = [0, 128], sizes = [8, 128], strides = [1, 1]} : vector<8x512xf32> to vector<8x128xf32>
    %231 = arith.negf %230 : vector<8x128xf32>
    %232 = math.exp %231 : vector<8x128xf32>
    %cst_64 = arith.constant 1.000000e+00 : f32
    %233 = vector.broadcast %cst_64 : f32 to vector<8x128xf32>
    %234 = arith.addf %233, %232 : vector<8x128xf32>
    %235 = arith.divf %233, %234 : vector<8x128xf32>
    %236 = vector.extract_strided_slice %223 {offsets = [0, 256], sizes = [8, 128], strides = [1, 1]} : vector<8x512xf32> to vector<8x128xf32>
    %237 = math.tanh %236 : vector<8x128xf32>
    %238 = vector.extract_strided_slice %223 {offsets = [0, 384], sizes = [8, 128], strides = [1, 1]} : vector<8x512xf32> to vector<8x128xf32>
    %239 = arith.negf %238 : vector<8x128xf32>
    %240 = math.exp %239 : vector<8x128xf32>
    %cst_65 = arith.constant 1.000000e+00 : f32
    %241 = vector.broadcast %cst_65 : f32 to vector<8x128xf32>
    %242 = arith.addf %241, %240 : vector<8x128xf32>
    %243 = arith.divf %241, %242 : vector<8x128xf32>
    %244 = arith.mulf %235, %216 : vector<8x128xf32>
    %245 = arith.mulf %229, %237 : vector<8x128xf32>
    %246 = arith.addf %244, %245 : vector<8x128xf32>
    %247 = math.tanh %246 : vector<8x128xf32>
    %248 = arith.mulf %243, %247 : vector<8x128xf32>
    %c0_66 = arith.constant 0 : index
    %c0_67 = arith.constant 0 : index
    %249 = vector.load %arg4[%c0_66, %c0_67] : memref<128x2xf32, #tpu.memory_space<vmem>>, vector<128x2xf32>
    %cst_68 = arith.constant dense<0.000000e+00> : vector<8x2xf32>
    %250 = tpu.matmul %248, %249, %cst_68 {dimension_numbers = #tpu.dot_dimension_numbers<[1], [0], [0], [1], [0, 0, 1, 1], [], []>} : vector<8x128xf32>, vector<128x2xf32>, vector<8x2xf32> -> vector<8x2xf32>
    %c0_69 = arith.constant 0 : index
    %c0_70 = arith.constant 0 : index
    %251 = vector.load %arg5[%c0_69, %c0_70] : memref<1x2xf32, #tpu.memory_space<vmem>>, vector<1x2xf32>
    %252 = vector.broadcast %251 : vector<1x2xf32> to vector<8x2xf32>
    %253 = arith.addf %250, %252 : vector<8x2xf32>
    %254 = vector.extract_strided_slice %253 {offsets = [0, 0], sizes = [2, 2], strides = [1, 1]} : vector<8x2xf32> to vector<2x2xf32>
    %c0_71 = arith.constant 0 : index
    %c0_72 = arith.constant 0 : index
    %255 = vector.load %arg6[%c0_71, %c0_72] : memref<2x2xf32, #tpu.memory_space<vmem>>, vector<2x2xf32>
    tpu.vector_store %arg6[%c0_71, %c0_72], %254 {strides = array<i32>} : memref<2x2xf32, #tpu.memory_space<vmem>>, vector<2x2xf32>,
    return
  }
}

</mosaic_0001>

<llo_original>
// kernel: tpu_custom_call.1
$region0: #{tpu_custom_call.1}
  #allocation0 [shape = 'u32[]', space=smem, size = 0x4, offset = 0x4, fixed_abs, tag = 'smem constant byte address 0x4 - core index']
  #allocation1 [shape = 'u32[144,128]{1,0:T(1,128)}', space=vmem, size = 0x12000, scoped, tag = 'internal scratch']
  #allocation2 [shape = 'f32[64,512]{1,0:T(8,128)}', space=vmem, size = 0x20000, scoped, tag = 'scratch operand']
  %s0 = inlined_call_operand.vmem [shape: bf16[64,16], index: 0, kind: input, shape index: {}]
  %s1 = inlined_call_operand.vmem [shape: bf16[16,512], index: 1, kind: input, shape index: {}]
  %s2 = inlined_call_operand.hbm [shape: bf16[128,512], index: 2, kind: input, shape index: {}]
  %s3 = inlined_call_operand.vmem [shape: f32[1,512], index: 3, kind: input, shape index: {}]
  %s4 = inlined_call_operand.vmem [shape: f32[128,2], index: 4, kind: input, shape index: {}]
  %s5 = inlined_call_operand.vmem [shape: f32[1,2], index: 5, kind: input, shape index: {}]
  %s6 = inlined_call_operand.hbm [shape: f32[2,2], index: 6, kind: output, shape index: {}]
  %s7 = sld [smem:[#allocation0]]
  $region38: #{tpu_custom_call.1} parent=0
    _
  %s9 = ssub.s32 1, %s7
  %s10 = scalar_select 0, %s9, %s7
  $region1: #{tpu_custom_call.1} parent=0
    #allocation3 [shape = 'u8[131072]{0}', space=vmem, size = 0x20000, scoped, tag = 'input window, operand 2, single buffered']
    #allocation4 [shape = 's32[1]{0}', space=sflag, size = 0x4, scoped, tag = 'scoped memory for tpu_custom_call.1']
    #allocation5 [shape = 's32[1]{0}', space=sflag, size = 0x4, scoped, tag = 'scoped memory for tpu_custom_call.1']
    #allocation6 [shape = 'u8[1024]{0}', space=vmem, size = 0x400, scoped, tag = 'output window, operand 0, single buffered']
    %11 = vsyncpa [#allocation4], 0
    %12 = vsyncpa [#allocation5], 0
    // Predicated region
    $region2: #{tpu_custom_call.1} parent=1 // pred_check
      _
    $region3: #{tpu_custom_call.1} parent=1 // pred_check_branch
      %14 = sbr.rel (0) target = $region5
    $region4: #{tpu_custom_call.1} parent=1 // pred_region
      _
    $region5: #{tpu_custom_call.1} parent=1 // pred_fallthru
      _
    // Predicated region
    $region6: #{tpu_custom_call.1} parent=1 // pred_check
      _
    $region7: #{tpu_custom_call.1} parent=1 // pred_check_branch
      %16 = sbr.rel (0) target = $region9
    $region8: #{tpu_custom_call.1} parent=1 // pred_region
      _
    $region9: #{tpu_custom_call.1} parent=1 // pred_fallthru
      _
    // Predicated region
    $region10: #{tpu_custom_call.1} parent=1 // pred_check
      _
    $region11: #{tpu_custom_call.1} parent=1 // pred_check_branch
      %18 = sbr.rel (0) target = $region13
    $region12: #{tpu_custom_call.1} parent=1 // pred_region
      %s20 = ssub.s32 4096, 4096
      %21 = vsyncadd [#allocation4], %s20
      %s22 = sshll.u32 [#allocation3], 4
      %s23 = int_to_ptr.vmem [resolvable:$true] %s22
      %28 = dma.hbm_to_vmem [thread:$0]  %s2, 4096, %s23, [#allocation4], 256, 256, 16
    $region13: #{tpu_custom_call.1} parent=1 // pred_fallthru
      _
    // Predicated region
    $region14: #{tpu_custom_call.1} parent=1 // pred_check
      _
    $region15: #{tpu_custom_call.1} parent=1 // pred_check_branch
      %30 = sbr.rel (0) target = $region17
    $region16: #{tpu_custom_call.1} parent=1 // pred_region
      _
    $region17: #{tpu_custom_call.1} parent=1 // pred_fallthru
      _
    // Predicated region
    $region18: #{tpu_custom_call.1} parent=1 // pred_check
      _
    $region19: #{tpu_custom_call.1} parent=1 // pred_check_branch
      %32 = sbr.rel (0) target = $region21
    $region20: #{tpu_custom_call.1} parent=1 // pred_region
      _
    $region21: #{tpu_custom_call.1} parent=1 // pred_fallthru
      _
    // Predicated region
    $region22: #{tpu_custom_call.1} parent=1 // pred_check
      _
    $region23: #{tpu_custom_call.1} parent=1 // pred_check_branch
      %34 = sbr.rel (0) target = $region25
    $region24: #{tpu_custom_call.1} parent=1 // pred_region
      _
    $region25: #{tpu_custom_call.1} parent=1 // pred_fallthru
      _
    // Predicated region
    $region26: #{tpu_custom_call.1} parent=1 // pred_check
      _
    $region27: #{tpu_custom_call.1} parent=1 // pred_check_branch
      %36 = sbr.rel (0) target = $region29
    $region28: #{tpu_custom_call.1} parent=1 // pred_region
      %37 = dma.done [#allocation4], 4096
    $region29: #{tpu_custom_call.1} parent=1 // pred_fallthru
      _
    %v39 = vld [vmem:[%s0] sm:$0xf]
    %v40 = vld [vmem:[%s0 + $0x4] sm:$0xf]
    %v41 = vld [vmem:[%s0 + $0x8] sm:$0xf]
    %v42 = vld [vmem:[%s0 + $0xc] sm:$0xf]
    %v43 = vld [vmem:[%s0 + $0x10] sm:$0xf]
    %v44 = vld [vmem:[%s0 + $0x14] sm:$0xf]
    %v45 = vld [vmem:[%s0 + $0x18] sm:$0xf]
    %v46 = vld [vmem:[%s0 + $0x1c] sm:$0xf]
    %v47 = vld [vmem:[%s1] sm:$0xff]
    %v48 = vld [vmem:[%s1 + $0x8] sm:$0xff]
    %v49 = vld [vmem:[%s1 + $0x10] sm:$0xff]
    %v50 = vld [vmem:[%s1 + $0x18] sm:$0xff]
    %v51 = vld [vmem:[%s3] sm:$0xf]
    %v53 = vlaneseq
    %v54 = vshrl.u32 %v53, 7
    %v55 = vsub.s32 0, %v54
    %v56 = vrot.slane %v51, %v55
    %v57 = vlaneseq
    %v58 = vshrl.u32 %v57, 7
    %v59 = vsub.s32 1, %v58
    %v60 = vrot.slane %v51, %v59
    %v61 = vlaneseq
    %v62 = vshrl.u32 %v61, 7
    %v63 = vsub.s32 2, %v62
    %v64 = vrot.slane %v51, %v63
    %v65 = vlaneseq
    %v66 = vshrl.u32 %v65, 7
    %v67 = vsub.s32 3, %v66
    %v68 = vrot.slane %v51, %v67
    %v81 = vunpack.c.l.b16 %v39
    %v82 = vunpack.c.l.b16 %v40
    %v83 = vunpack.c.l.b16 %v41
    %v84 = vunpack.c.l.b16 %v42
    %v85 = vunpack.c.l.b16 %v43
    %v86 = vunpack.c.l.b16 %v44
    %v87 = vunpack.c.l.b16 %v45
    %v88 = vunpack.c.l.b16 %v46
    %v89 = vpack.c.b16 %v82, %v81
    %v90 = vpack.c.b16 %v84, %v83
    %v91 = vpack.c.b16 %v86, %v85
    %v92 = vpack.c.b16 %v88, %v87
    %v97 = vunpack.c.l.b16 %v47
    %v98 = vunpack.c.h.b16 %v47
    %v99 = vunpack.c.l.b16 %v48
    %v100 = vunpack.c.h.b16 %v48
    %v101 = vunpack.c.l.b16 %v49
    %v102 = vunpack.c.h.b16 %v49
    %v103 = vunpack.c.l.b16 %v50
    %v104 = vunpack.c.h.b16 %v50
    %v105 = vpack.c.b16 %v101, %v97
    %v106 = vpack.c.b16 %v102, %v98
    %v107 = vpack.c.b16 %v103, %v99
    %v108 = vpack.c.b16 %v104, %v100
    %vm113 = vcmask 130048
    %v115 = vsel %vm113, %v89, 0
    %v118 = vsel %vm113, %v90, 0
    %v121 = vsel %vm113, %v91, 0
    %v124 = vsel %vm113, %v92, 0
    %126 = vmatprep.subr.bf16.mxu0 0
    %127 = vmatpush1.bf16.msra.mxu0 0
    %128 = vmatprep.subr.bf16.mxu0 0
    %129 = vmatpush1.bf16.msra.mxu0 0
    %130 = vmatprep.subr.bf16.mxu0 0
    %131 = vmatpush1.bf16.msra.mxu0 0
    %132 = vmatprep.subr.bf16.mxu0 0
    %133 = vmatpush1.bf16.msra.mxu0 0
    %134 = vmatprep.subr.bf16.mxu0 0
    %135 = vmatpush1.bf16.msra.mxu0 0
    %136 = vmatprep.subr.bf16.mxu0 0
    %137 = vmatpush1.bf16.msra.mxu0 0
    %138 = vmatprep.subr.bf16.mxu0 0
    %139 = vmatpush1.bf16.msra.mxu0 0
    %140 = vmatprep.subr.bf16.mxu0 %v106
    %141 = vmatpush1.bf16.msra.mxu0 %v105
    %142 = vmatprep.subr.bf16.mxu0 0
    %143 = vmatpush2.bf16.msra.mxu0 0
    %144 = vmatprep.subr.bf16.mxu0 0
    %145 = vmatpush2.bf16.msra.mxu0 0
    %146 = vmatprep.subr.bf16.mxu0 0
    %147 = vmatpush2.bf16.msra.mxu0 0
    %148 = vmatprep.subr.bf16.mxu0 0
    %149 = vmatpush2.bf16.msra.mxu0 0
    %150 = vmatprep.subr.bf16.mxu0 0
    %151 = vmatpush2.bf16.msra.mxu0 0
    %152 = vmatprep.subr.bf16.mxu0 0
    %153 = vmatpush2.bf16.msra.mxu0 0
    %154 = vmatprep.subr.bf16.mxu0 0
    %155 = vmatpush2.bf16.msra.mxu0 0
    %156 = vmatprep.subr.bf16.mxu0 0
    %157 = vmatpush2.bf16.msra.mxu0 0
    %158 = vmatprep.mubr.bf16.mxu0 0
    %159 = vmatmul.mubr.bf16.gmra.mxu0 %v115
    %v160 = vpop.f32.mrf.mxu0
    %v161 = vadd.f32 %v56, %v160
    %v162 = vpop.f32.mrf.mxu0
    %v163 = vadd.f32 %v60, %v162
    %v164 = vpop.f32.mrf.mxu0
    %v165 = vadd.f32 %v56, %v164
    %v166 = vpop.f32.mrf.mxu0
    %v167 = vadd.f32 %v60, %v166
    %168 = vmatprep.mubr.bf16.mxu0 0
    %169 = vmatmul.mubr.bf16.gmra.mxu0 %v118
    %v170 = vpop.f32.mrf.mxu0
    %v171 = vadd.f32 %v56, %v170
    %v172 = vpop.f32.mrf.mxu0
    %v173 = vadd.f32 %v60, %v172
    %v174 = vpop.f32.mrf.mxu0
    %v175 = vadd.f32 %v56, %v174
    %v176 = vpop.f32.mrf.mxu0
    %v177 = vadd.f32 %v60, %v176
    %178 = vmatprep.mubr.bf16.mxu0 0
    %179 = vmatmul.mubr.bf16.gmra.mxu0 %v121
    %v180 = vpop.f32.mrf.mxu0
    %v181 = vadd.f32 %v56, %v180
    %v182 = vpop.f32.mrf.mxu0
    %v183 = vadd.f32 %v60, %v182
    %v184 = vpop.f32.mrf.mxu0
    %v185 = vadd.f32 %v56, %v184
    %v186 = vpop.f32.mrf.mxu0
    %v187 = vadd.f32 %v60, %v186
    %188 = vmatprep.mubr.bf16.mxu0 0
    %189 = vmatmul.mubr.bf16.gmra.mxu0 %v124
    %v190 = vpop.f32.mrf.mxu0
    %v191 = vadd.f32 %v56, %v190
    %v192 = vpop.f32.mrf.mxu0
    %v193 = vadd.f32 %v60, %v192
    %v194 = vpop.f32.mrf.mxu0
    %v195 = vadd.f32 %v56, %v194
    %v196 = vpop.f32.mrf.mxu0
    %v197 = vadd.f32 %v60, %v196
    %198 = vdwg.mxu0
    %199 = vmatprep.subr.bf16.mxu0 0
    %200 = vmatpush1.bf16.msra.mxu0 0
    %201 = vmatprep.subr.bf16.mxu0 0
    %202 = vmatpush1.bf16.msra.mxu0 0
    %203 = vmatprep.subr.bf16.mxu0 0
    %204 = vmatpush1.bf16.msra.mxu0 0
    %205 = vmatprep.subr.bf16.mxu0 0
    %206 = vmatpush1.bf16.msra.mxu0 0
    %207 = vmatprep.subr.bf16.mxu0 0
    %208 = vmatpush1.bf16.msra.mxu0 0
    %209 = vmatprep.subr.bf16.mxu0 0
    %210 = vmatpush1.bf16.msra.mxu0 0
    %211 = vmatprep.subr.bf16.mxu0 0
    %212 = vmatpush1.bf16.msra.mxu0 0
    %213 = vmatprep.subr.bf16.mxu0 %v108
    %214 = vmatpush1.bf16.msra.mxu0 %v107
    %215 = vmatprep.subr.bf16.mxu0 0
    %216 = vmatpush2.bf16.msra.mxu0 0
    %217 = vmatprep.subr.bf16.mxu0 0
    %218 = vmatpush2.bf16.msra.mxu0 0
    %219 = vmatprep.subr.bf16.mxu0 0
    %220 = vmatpush2.bf16.msra.mxu0 0
    %221 = vmatprep.subr.bf16.mxu0 0
    %222 = vmatpush2.bf16.msra.mxu0 0
    %223 = vmatprep.subr.bf16.mxu0 0
    %224 = vmatpush2.bf16.msra.mxu0 0
    %225 = vmatprep.subr.bf16.mxu0 0
    %226 = vmatpush2.bf16.msra.mxu0 0
    %227 = vmatprep.subr.bf16.mxu0 0
    %228 = vmatpush2.bf16.msra.mxu0 0
    %229 = vmatprep.subr.bf16.mxu0 0
    %230 = vmatpush2.bf16.msra.mxu0 0
    %231 = vmatprep.mubr.bf16.mxu0 0
    %232 = vmatmul.mubr.bf16.gmra.mxu0 %v115
    %v233 = vpop.f32.mrf.mxu0
    %v234 = vadd.f32 %v64, %v233
    %v235 = vpop.f32.mrf.mxu0
    %v236 = vadd.f32 %v68, %v235
    %v237 = vpop.f32.mrf.mxu0
    %v238 = vadd.f32 %v64, %v237
    %v239 = vpop.f32.mrf.mxu0
    %v240 = vadd.f32 %v68, %v239
    %241 = vmatprep.mubr.bf16.mxu0 0
    %242 = vmatmul.mubr.bf16.gmra.mxu0 %v118
    %v243 = vpop.f32.mrf.mxu0
    %v244 = vadd.f32 %v64, %v243
    %v245 = vpop.f32.mrf.mxu0
    %v246 = vadd.f32 %v68, %v245
    %v247 = vpop.f32.mrf.mxu0
    %v248 = vadd.f32 %v64, %v247
    %v249 = vpop.f32.mrf.mxu0
    %v250 = vadd.f32 %v68, %v249
    %251 = vmatprep.mubr.bf16.mxu0 0
    %252 = vmatmul.mubr.bf16.gmra.mxu0 %v121
    %v253 = vpop.f32.mrf.mxu0
    %v254 = vadd.f32 %v64, %v253
    %v255 = vpop.f32.mrf.mxu0
    %v256 = vadd.f32 %v68, %v255
    %v257 = vpop.f32.mrf.mxu0
    %v258 = vadd.f32 %v64, %v257
    %v259 = vpop.f32.mrf.mxu0
    %v260 = vadd.f32 %v68, %v259
    %261 = vmatprep.mubr.bf16.mxu0 0
    %262 = vmatmul.mubr.bf16.gmra.mxu0 %v124
    %v263 = vpop.f32.mrf.mxu0
    %v264 = vadd.f32 %v64, %v263
    %v265 = vpop.f32.mrf.mxu0
    %v266 = vadd.f32 %v68, %v265
    %v267 = vpop.f32.mrf.mxu0
    %v268 = vadd.f32 %v64, %v267
    %v269 = vpop.f32.mrf.mxu0
    %v270 = vadd.f32 %v68, %v269
    %271 = vdwg.mxu0
    %272 = vst [vmem:[#allocation2] sm:$0xff] %v161
    %273 = vst [vmem:[#allocation2 + $0x8] sm:$0xff] %v163
    %274 = vst [vmem:[#allocation2 + $0x10] sm:$0xff] %v234
    %275 = vst [vmem:[#allocation2 + $0x18] sm:$0xff] %v236
    %276 = vst [vmem:[#allocation2 + $0x20] sm:$0xff] %v165
    %277 = vst [vmem:[#allocation2 + $0x28] sm:$0xff] %v167
    %278 = vst [vmem:[#allocation2 + $0x30] sm:$0xff] %v238
    %279 = vst [vmem:[#allocation2 + $0x38] sm:$0xff] %v240
    %280 = vst [vmem:[#allocation2 + $0x40] sm:$0xff] %v171
    %281 = vst [vmem:[#allocation2 + $0x48] sm:$0xff] %v173
    %282 = vst [vmem:[#allocation2 + $0x50] sm:$0xff] %v244
    %283 = vst [vmem:[#allocation2 + $0x58] sm:$0xff] %v246
    %284 = vst [vmem:[#allocation2 + $0x60] sm:$0xff] %v175
    %285 = vst [vmem:[#allocation2 + $0x68] sm:$0xff] %v177
    %286 = vst [vmem:[#allocation2 + $0x70] sm:$0xff] %v248
    %287 = vst [vmem:[#allocation2 + $0x78] sm:$0xff] %v250
    %288 = vst [vmem:[#allocation2 + $0x80] sm:$0xff] %v181
    %289 = vst [vmem:[#allocation2 + $0x88] sm:$0xff] %v183
    %290 = vst [vmem:[#allocation2 + $0x90] sm:$0xff] %v254
    %291 = vst [vmem:[#allocation2 + $0x98] sm:$0xff] %v256
    %292 = vst [vmem:[#allocation2 + $0xa0] sm:$0xff] %v185
    %293 = vst [vmem:[#allocation2 + $0xa8] sm:$0xff] %v187
    %294 = vst [vmem:[#allocation2 + $0xb0] sm:$0xff] %v258
    %295 = vst [vmem:[#allocation2 + $0xb8] sm:$0xff] %v260
    %296 = vst [vmem:[#allocation2 + $0xc0] sm:$0xff] %v191
    %297 = vst [vmem:[#allocation2 + $0xc8] sm:$0xff] %v193
    %298 = vst [vmem:[#allocation2 + $0xd0] sm:$0xff] %v264
    %299 = vst [vmem:[#allocation2 + $0xd8] sm:$0xff] %v266
    %300 = vst [vmem:[#allocation2 + $0xe0] sm:$0xff] %v195
    %301 = vst [vmem:[#allocation2 + $0xe8] sm:$0xff] %v197
    %302 = vst [vmem:[#allocation2 + $0xf0] sm:$0xff] %v268
    %303 = vst [vmem:[#allocation2 + $0xf8] sm:$0xff] %v270
    %v304 = vld [vmem:[#allocation2] sm:$0xff]
    %v305 = vld [vmem:[#allocation2 + $0x8] sm:$0xff]
    %v306 = vld [vmem:[#allocation2 + $0x10] sm:$0xff]
    %v307 = vld [vmem:[#allocation2 + $0x18] sm:$0xff]
    %v308 = vld [vmem:[#allocation3] sm:$0xff]
    %v309 = vld [vmem:[#allocation3 + $0x8] sm:$0xff]
    %v310 = vld [vmem:[#allocation3 + $0x10] sm:$0xff]
    %v311 = vld [vmem:[#allocation3 + $0x18] sm:$0xff]
    %v312 = vld [vmem:[#allocation3 + $0x20] sm:$0xff]
    %v313 = vld [vmem:[#allocation3 + $0x28] sm:$0xff]
    %v314 = vld [vmem:[#allocation3 + $0x30] sm:$0xff]
    %v315 = vld [vmem:[#allocation3 + $0x38] sm:$0xff]
    %v316 = vld [vmem:[#allocation3 + $0x40] sm:$0xff]
    %v317 = vld [vmem:[#allocation3 + $0x48] sm:$0xff]
    %v318 = vld [vmem:[#allocation3 + $0x50] sm:$0xff]
    %v319 = vld [vmem:[#allocation3 + $0x58] sm:$0xff]
    %v320 = vld [vmem:[#allocation3 + $0x60] sm:$0xff]
    %v321 = vld [vmem:[#allocation3 + $0x68] sm:$0xff]
    %v322 = vld [vmem:[#allocation3 + $0x70] sm:$0xff]
    %v323 = vld [vmem:[#allocation3 + $0x78] sm:$0xff]
    %v324 = vld [vmem:[#allocation3 + $0x80] sm:$0xff]
    %v325 = vld [vmem:[#allocation3 + $0x88] sm:$0xff]
    %v326 = vld [vmem:[#allocation3 + $0x90] sm:$0xff]
    %v327 = vld [vmem:[#allocation3 + $0x98] sm:$0xff]
    %v328 = vld [vmem:[#allocation3 + $0xa0] sm:$0xff]
    %v329 = vld [vmem:[#allocation3 + $0xa8] sm:$0xff]
    %v330 = vld [vmem:[#allocation3 + $0xb0] sm:$0xff]
    %v331 = vld [vmem:[#allocation3 + $0xb8] sm:$0xff]
    %v332 = vld [vmem:[#allocation3 + $0xc0] sm:$0xff]
    %v333 = vld [vmem:[#allocation3 + $0xc8] sm:$0xff]
    %v334 = vld [vmem:[#allocation3 + $0xd0] sm:$0xff]
    %v335 = vld [vmem:[#allocation3 + $0xd8] sm:$0xff]
    %v336 = vld [vmem:[#allocation3 + $0xe0] sm:$0xff]
    %v337 = vld [vmem:[#allocation3 + $0xe8] sm:$0xff]
    %v338 = vld [vmem:[#allocation3 + $0xf0] sm:$0xff]
    %v339 = vld [vmem:[#allocation3 + $0xf8] sm:$0xff]
    %v372 = vunpack.c.l.b16 %v308
    %v373 = vunpack.c.h.b16 %v308
    %v374 = vunpack.c.l.b16 %v309
    %v375 = vunpack.c.h.b16 %v309
    %v376 = vunpack.c.l.b16 %v310
    %v377 = vunpack.c.h.b16 %v310
    %v378 = vunpack.c.l.b16 %v311
    %v379 = vunpack.c.h.b16 %v311
    %v380 = vunpack.c.l.b16 %v312
    %v381 = vunpack.c.h.b16 %v312
    %v382 = vunpack.c.l.b16 %v313
    %v383 = vunpack.c.h.b16 %v313
    %v384 = vunpack.c.l.b16 %v314
    %v385 = vunpack.c.h.b16 %v314
    %v386 = vunpack.c.l.b16 %v315
    %v387 = vunpack.c.h.b16 %v315
    %v388 = vunpack.c.l.b16 %v316
    %v389 = vunpack.c.h.b16 %v316
    %v390 = vunpack.c.l.b16 %v317
    %v391 = vunpack.c.h.b16 %v317
    %v392 = vunpack.c.l.b16 %v318
    %v393 = vunpack.c.h.b16 %v318
    %v394 = vunpack.c.l.b16 %v319
    %v395 = vunpack.c.h.b16 %v319
    %v396 = vunpack.c.l.b16 %v320
    %v397 = vunpack.c.h.b16 %v320
    %v398 = vunpack.c.l.b16 %v321
    %v399 = vunpack.c.h.b16 %v321
    %v400 = vunpack.c.l.b16 %v322
    %v401 = vunpack.c.h.b16 %v322
    %v402 = vunpack.c.l.b16 %v323
    %v403 = vunpack.c.h.b16 %v323
    %v404 = vunpack.c.l.b16 %v324
    %v405 = vunpack.c.h.b16 %v324
    %v406 = vunpack.c.l.b16 %v325
    %v407 = vunpack.c.h.b16 %v325
    %v408 = vunpack.c.l.b16 %v326
    %v409 = vunpack.c.h.b16 %v326
    %v410 = vunpack.c.l.b16 %v327
    %v411 = vunpack.c.h.b16 %v327
    %v412 = vunpack.c.l.b16 %v328
    %v413 = vunpack.c.h.b16 %v328
    %v414 = vunpack.c.l.b16 %v329
    %v415 = vunpack.c.h.b16 %v329
    %v416 = vunpack.c.l.b16 %v330
    %v417 = vunpack.c.h.b16 %v330
    %v418 = vunpack.c.l.b16 %v331
    %v419 = vunpack.c.h.b16 %v331
    %v420 = vunpack.c.l.b16 %v332
    %v421 = vunpack.c.h.b16 %v332
    %v422 = vunpack.c.l.b16 %v333
    %v423 = vunpack.c.h.b16 %v333
    %v424 = vunpack.c.l.b16 %v334
    %v425 = vunpack.c.h.b16 %v334
    %v426 = vunpack.c.l.b16 %v335
    %v427 = vunpack.c.h.b16 %v335
    %v428 = vunpack.c.l.b16 %v336
    %v429 = vunpack.c.h.b16 %v336
    %v430 = vunpack.c.l.b16 %v337
    %v431 = vunpack.c.h.b16 %v337
    %v432 = vunpack.c.l.b16 %v338
    %v433 = vunpack.c.h.b16 %v338
    %v434 = vunpack.c.l.b16 %v339
    %v435 = vunpack.c.h.b16 %v339
    %v436 = vpack.c.b16 %v376, %v372
    %v437 = vpack.c.b16 %v377, %v373
    %v438 = vpack.c.b16 %v378, %v374
    %v439 = vpack.c.b16 %v379, %v375
    %v440 = vpack.c.b16 %v384, %v380
    %v441 = vpack.c.b16 %v385, %v381
    %v442 = vpack.c.b16 %v386, %v382
    %v443 = vpack.c.b16 %v387, %v383
    %v444 = vpack.c.b16 %v392, %v388
    %v445 = vpack.c.b16 %v393, %v389
    %v446 = vpack.c.b16 %v394, %v390
    %v447 = vpack.c.b16 %v395, %v391
    %v448 = vpack.c.b16 %v400, %v396
    %v449 = vpack.c.b16 %v401, %v397
    %v450 = vpack.c.b16 %v402, %v398
    %v451 = vpack.c.b16 %v403, %v399
    %v452 = vpack.c.b16 %v408, %v404
    %v453 = vpack.c.b16 %v409, %v405
    %v454 = vpack.c.b16 %v410, %v406
    %v455 = vpack.c.b16 %v411, %v407
    %v456 = vpack.c.b16 %v416, %v412
    %v457 = vpack.c.b16 %v417, %v413
    %v458 = vpack.c.b16 %v418, %v414
    %v459 = vpack.c.b16 %v419, %v415
    %v460 = vpack.c.b16 %v424, %v420
    %v461 = vpack.c.b16 %v425, %v421
    %v462 = vpack.c.b16 %v426, %v422
    %v463 = vpack.c.b16 %v427, %v423
    %v464 = vpack.c.b16 %v432, %v428
    %v465 = vpack.c.b16 %v433, %v429
    %v466 = vpack.c.b16 %v434, %v430
    %v467 = vpack.c.b16 %v435, %v431
    %500 = vmatprep.subr.bf16.mxu0 %v465
    %501 = vmatpush1.bf16.msra.mxu0 %v464
    %502 = vmatprep.subr.bf16.mxu0 %v461
    %503 = vmatpush1.bf16.msra.mxu0 %v460
    %504 = vmatprep.subr.bf16.mxu0 %v457
    %505 = vmatpush1.bf16.msra.mxu0 %v456
    %506 = vmatprep.subr.bf16.mxu0 %v453
    %507 = vmatpush1.bf16.msra.mxu0 %v452
    %508 = vmatprep.subr.bf16.mxu0 %v449
    %509 = vmatpush1.bf16.msra.mxu0 %v448
    %510 = vmatprep.subr.bf16.mxu0 %v445
    %511 = vmatpush1.bf16.msra.mxu0 %v444
    %512 = vmatprep.subr.bf16.mxu0 %v441
    %513 = vmatpush1.bf16.msra.mxu0 %v440
    %514 = vmatprep.subr.bf16.mxu0 %v437
    %515 = vmatpush1.bf16.msra.mxu0 %v436
    %516 = vmatprep.subr.bf16.mxu0 0
    %517 = vmatpush2.bf16.msra.mxu0 0
    %518 = vmatprep.subr.bf16.mxu0 0
    %519 = vmatpush2.bf16.msra.mxu0 0
    %520 = vmatprep.subr.bf16.mxu0 0
    %521 = vmatpush2.bf16.msra.mxu0 0
    %522 = vmatprep.subr.bf16.mxu0 0
    %523 = vmatpush2.bf16.msra.mxu0 0
    %524 = vmatprep.subr.bf16.mxu0 0
    %525 = vmatpush2.bf16.msra.mxu0 0
    %526 = vmatprep.subr.bf16.mxu0 0
    %527 = vmatpush2.bf16.msra.mxu0 0
    %528 = vmatprep.subr.bf16.mxu0 0
    %529 = vmatpush2.bf16.msra.mxu0 0
    %530 = vmatprep.subr.bf16.mxu0 0
    %531 = vmatpush2.bf16.msra.mxu0 0
    %532 = vmatprep.mubr.bf16.mxu0 0
    %533 = vmatmul.mubr.bf16.gmra.mxu0 0
    %v534 = vpop.f32.mrf.mxu0
    %v535 = vadd.f32 0.0, %v534
    %v536 = vpop.f32.mrf.mxu0
    %v537 = vadd.f32 0.0, %v536
    %v538 = vpop.f32.mrf.mxu0
    %v539 = vpop.f32.mrf.mxu0
    %540 = vdwg.mxu0
    %541 = vmatprep.subr.bf16.mxu0 %v467
    %542 = vmatpush1.bf16.msra.mxu0 %v466
    %543 = vmatprep.subr.bf16.mxu0 %v463
    %544 = vmatpush1.bf16.msra.mxu0 %v462
    %545 = vmatprep.subr.bf16.mxu0 %v459
    %546 = vmatpush1.bf16.msra.mxu0 %v458
    %547 = vmatprep.subr.bf16.mxu0 %v455
    %548 = vmatpush1.bf16.msra.mxu0 %v454
    %549 = vmatprep.subr.bf16.mxu0 %v451
    %550 = vmatpush1.bf16.msra.mxu0 %v450
    %551 = vmatprep.subr.bf16.mxu0 %v447
    %552 = vmatpush1.bf16.msra.mxu0 %v446
    %553 = vmatprep.subr.bf16.mxu0 %v443
    %554 = vmatpush1.bf16.msra.mxu0 %v442
    %555 = vmatprep.subr.bf16.mxu0 %v439
    %556 = vmatpush1.bf16.msra.mxu0 %v438
    %557 = vmatprep.subr.bf16.mxu0 0
    %558 = vmatpush2.bf16.msra.mxu0 0
    %559 = vmatprep.subr.bf16.mxu0 0
    %560 = vmatpush2.bf16.msra.mxu0 0
    %561 = vmatprep.subr.bf16.mxu0 0
    %562 = vmatpush2.bf16.msra.mxu0 0
    %563 = vmatprep.subr.bf16.mxu0 0
    %564 = vmatpush2.bf16.msra.mxu0 0
    %565 = vmatprep.subr.bf16.mxu0 0
    %566 = vmatpush2.bf16.msra.mxu0 0
    %567 = vmatprep.subr.bf16.mxu0 0
    %568 = vmatpush2.bf16.msra.mxu0 0
    %569 = vmatprep.subr.bf16.mxu0 0
    %570 = vmatpush2.bf16.msra.mxu0 0
    %571 = vmatprep.subr.bf16.mxu0 0
    %572 = vmatpush2.bf16.msra.mxu0 0
    %573 = vmatprep.mubr.bf16.mxu0 0
    %574 = vmatmul.mubr.bf16.gmra.mxu0 0
    %v575 = vpop.f32.mrf.mxu0
    %v576 = vadd.f32 0.0, %v575
    %v577 = vpop.f32.mrf.mxu0
    %v578 = vadd.f32 0.0, %v577
    %v579 = vpop.f32.mrf.mxu0
    %v580 = vpop.f32.mrf.mxu0
    %581 = vdwg.mxu0
    %v582 = vadd.f32 %v304, %v535
    %v583 = vadd.f32 %v305, %v537
    %v584 = vadd.f32 %v306, %v576
    %v585 = vadd.f32 %v307, %v578
    %v586 = vxor.u32 %v582, 2147483648
    %v587 = vmul.f32 %v586, 1.442695
    %v588 = vpow.pop %v587
    %v589 = vadd.f32 %v588, 1.0
    %v590 = vrcp.pop %v589
    %v591 = vmul.f32 1.0, %v590
    %v592 = vxor.u32 %v583, 2147483648
    %v593 = vmul.f32 %v592, 1.442695
    %v594 = vpow.pop %v593
    %v595 = vadd.f32 %v594, 1.0
    %v596 = vrcp.pop %v595
    %v597 = vmul.f32 1.0, %v596
    %v598 = vtanh.pop %v584
    %v599 = vxor.u32 %v585, 2147483648
    %v600 = vmul.f32 %v599, 1.442695
    %v601 = vpow.pop %v600
    %v602 = vadd.f32 %v601, 1.0
    %v603 = vrcp.pop %v602
    %v604 = vmul.f32 1.0, %v603
    %v605 = vmul.f32 %v597, 0.0
    %v606 = vmul.f32 %v591, %v598
    %v607 = vadd.f32 %v605, %v606
    %v608 = vtanh.pop %v607
    %v609 = vmul.f32 %v604, %v608
    %v610 = vld [vmem:[#allocation2 + $0x20] sm:$0xff]
    %v611 = vld [vmem:[#allocation2 + $0x28] sm:$0xff]
    %v612 = vld [vmem:[#allocation2 + $0x30] sm:$0xff]
    %v613 = vld [vmem:[#allocation2 + $0x38] sm:$0xff]
    %v614 = vpack.c.bf16 %v609, %v609
    %615 = vmatprep.subr.bf16.mxu0 %v465
    %616 = vmatpush1.bf16.msra.mxu0 %v464
    %617 = vmatprep.subr.bf16.mxu0 %v461
    %618 = vmatpush1.bf16.msra.mxu0 %v460
    %619 = vmatprep.subr.bf16.mxu0 %v457
    %620 = vmatpush1.bf16.msra.mxu0 %v456
    %621 = vmatprep.subr.bf16.mxu0 %v453
    %622 = vmatpush1.bf16.msra.mxu0 %v452
    %623 = vmatprep.subr.bf16.mxu0 %v449
    %624 = vmatpush1.bf16.msra.mxu0 %v448
    %625 = vmatprep.subr.bf16.mxu0 %v445
    %626 = vmatpush1.bf16.msra.mxu0 %v444
    %627 = vmatprep.subr.bf16.mxu0 %v441
    %628 = vmatpush1.bf16.msra.mxu0 %v440
    %629 = vmatprep.subr.bf16.mxu0 %v437
    %630 = vmatpush1.bf16.msra.mxu0 %v436
    %631 = vmatprep.subr.bf16.mxu0 0
    %632 = vmatpush2.bf16.msra.mxu0 0
    %633 = vmatprep.subr.bf16.mxu0 0
    %634 = vmatpush2.bf16.msra.mxu0 0
    %635 = vmatprep.subr.bf16.mxu0 0
    %636 = vmatpush2.bf16.msra.mxu0 0
    %637 = vmatprep.subr.bf16.mxu0 0
    %638 = vmatpush2.bf16.msra.mxu0 0
    %639 = vmatprep.subr.bf16.mxu0 0
    %640 = vmatpush2.bf16.msra.mxu0 0
    %641 = vmatprep.subr.bf16.mxu0 0
    %642 = vmatpush2.bf16.msra.mxu0 0
    %643 = vmatprep.subr.bf16.mxu0 0
    %644 = vmatpush2.bf16.msra.mxu0 0
    %645 = vmatprep.subr.bf16.mxu0 0
    %646 = vmatpush2.bf16.msra.mxu0 0
    %647 = vmatprep.mubr.bf16.mxu0 0
    %648 = vmatmul.mubr.bf16.gmra.mxu0 %v614
    %v649 = vpop.f32.mrf.mxu0
    %v650 = vadd.f32 0.0, %v649
    %v651 = vpop.f32.mrf.mxu0
    %v652 = vadd.f32 0.0, %v651
    %v653 = vpop.f32.mrf.mxu0
    %v654 = vpop.f32.mrf.mxu0
    %655 = vdwg.mxu0
    %656 = vmatprep.subr.bf16.mxu0 %v467
    %657 = vmatpush1.bf16.msra.mxu0 %v466
    %658 = vmatprep.subr.bf16.mxu0 %v463
    %659 = vmatpush1.bf16.msra.mxu0 %v462
    %660 = vmatprep.subr.bf16.mxu0 %v459
    %661 = vmatpush1.bf16.msra.mxu0 %v458
    %662 = vmatprep.subr.bf16.mxu0 %v455
    %663 = vmatpush1.bf16.msra.mxu0 %v454
    %664 = vmatprep.subr.bf16.mxu0 %v451
    %665 = vmatpush1.bf16.msra.mxu0 %v450
    %666 = vmatprep.subr.bf16.mxu0 %v447
    %667 = vmatpush1.bf16.msra.mxu0 %v446
    %668 = vmatprep.subr.bf16.mxu0 %v443
    %669 = vmatpush1.bf16.msra.mxu0 %v442
    %670 = vmatprep.subr.bf16.mxu0 %v439
    %671 = vmatpush1.bf16.msra.mxu0 %v438
    %672 = vmatprep.subr.bf16.mxu0 0
    %673 = vmatpush2.bf16.msra.mxu0 0
    %674 = vmatprep.subr.bf16.mxu0 0
    %675 = vmatpush2.bf16.msra.mxu0 0
    %676 = vmatprep.subr.bf16.mxu0 0
    %677 = vmatpush2.bf16.msra.mxu0 0
    %678 = vmatprep.subr.bf16.mxu0 0
    %679 = vmatpush2.bf16.msra.mxu0 0
    %680 = vmatprep.subr.bf16.mxu0 0
    %681 = vmatpush2.bf16.msra.mxu0 0
    %682 = vmatprep.subr.bf16.mxu0 0
    %683 = vmatpush2.bf16.msra.mxu0 0
    %684 = vmatprep.subr.bf16.mxu0 0
    %685 = vmatpush2.bf16.msra.mxu0 0
    %686 = vmatprep.subr.bf16.mxu0 0
    %687 = vmatpush2.bf16.msra.mxu0 0
    %688 = vmatprep.mubr.bf16.mxu0 0
    %689 = vmatmul.mubr.bf16.gmra.mxu0 %v614
    %v690 = vpop.f32.mrf.mxu0
    %v691 = vadd.f32 0.0, %v690
    %v692 = vpop.f32.mrf.mxu0
    %v693 = vadd.f32 0.0, %v692
    %v694 = vpop.f32.mrf.mxu0
    %v695 = vpop.f32.mrf.mxu0
    %696 = vdwg.mxu0
    %v697 = vadd.f32 %v610, %v650
    %v698 = vadd.f32 %v611, %v652
    %v699 = vadd.f32 %v612, %v691
    %v700 = vadd.f32 %v613, %v693
    %v701 = vxor.u32 %v697, 2147483648
    %v702 = vmul.f32 %v701, 1.442695
    %v703 = vpow.pop %v702
    %v704 = vadd.f32 %v703, 1.0
    %v705 = vrcp.pop %v704
    %v706 = vmul.f32 1.0, %v705
    %v707 = vxor.u32 %v698, 2147483648
    %v708 = vmul.f32 %v707, 1.442695
    %v709 = vpow.pop %v708
    %v710 = vadd.f32 %v709, 1.0
    %v711 = vrcp.pop %v710
    %v712 = vmul.f32 1.0, %v711
    %v713 = vtanh.pop %v699
    %v714 = vxor.u32 %v700, 2147483648
    %v715 = vmul.f32 %v714, 1.442695
    %v716 = vpow.pop %v715
    %v717 = vadd.f32 %v716, 1.0
    %v718 = vrcp.pop %v717
    %v719 = vmul.f32 1.0, %v718
    %v720 = vmul.f32 %v712, %v607
    %v721 = vmul.f32 %v706, %v713
    %v722 = vadd.f32 %v720, %v721
    %v723 = vtanh.pop %v722
    %v724 = vmul.f32 %v719, %v723
    %v725 = vld [vmem:[#allocation2 + $0x40] sm:$0xff]
    %v726 = vld [vmem:[#allocation2 + $0x48] sm:$0xff]
    %v727 = vld [vmem:[#allocation2 + $0x50] sm:$0xff]
    %v728 = vld [vmem:[#allocation2 + $0x58] sm:$0xff]
    %v729 = vpack.c.bf16 %v724, %v724
    %730 = vmatprep.subr.bf16.mxu0 %v465
    %731 = vmatpush1.bf16.msra.mxu0 %v464
    %732 = vmatprep.subr.bf16.mxu0 %v461
    %733 = vmatpush1.bf16.msra.mxu0 %v460
    %734 = vmatprep.subr.bf16.mxu0 %v457
    %735 = vmatpush1.bf16.msra.mxu0 %v456
    %736 = vmatprep.subr.bf16.mxu0 %v453
    %737 = vmatpush1.bf16.msra.mxu0 %v452
    %738 = vmatprep.subr.bf16.mxu0 %v449
    %739 = vmatpush1.bf16.msra.mxu0 %v448
    %740 = vmatprep.subr.bf16.mxu0 %v445
    %741 = vmatpush1.bf16.msra.mxu0 %v444
    %742 = vmatprep.subr.bf16.mxu0 %v441
    %743 = vmatpush1.bf16.msra.mxu0 %v440
    %744 = vmatprep.subr.bf16.mxu0 %v437
    %745 = vmatpush1.bf16.msra.mxu0 %v436
    %746 = vmatprep.subr.bf16.mxu0 0
    %747 = vmatpush2.bf16.msra.mxu0 0
    %748 = vmatprep.subr.bf16.mxu0 0
    %749 = vmatpush2.bf16.msra.mxu0 0
    %750 = vmatprep.subr.bf16.mxu0 0
    %751 = vmatpush2.bf16.msra.mxu0 0
    %752 = vmatprep.subr.bf16.mxu0 0
    %753 = vmatpush2.bf16.msra.mxu0 0
    %754 = vmatprep.subr.bf16.mxu0 0
    %755 = vmatpush2.bf16.msra.mxu0 0
    %756 = vmatprep.subr.bf16.mxu0 0
    %757 = vmatpush2.bf16.msra.mxu0 0
    %758 = vmatprep.subr.bf16.mxu0 0
    %759 = vmatpush2.bf16.msra.mxu0 0
    %760 = vmatprep.subr.bf16.mxu0 0
    %761 = vmatpush2.bf16.msra.mxu0 0
    %762 = vmatprep.mubr.bf16.mxu0 0
    %763 = vmatmul.mubr.bf16.gmra.mxu0 %v729
    %v764 = vpop.f32.mrf.mxu0
    %v765 = vadd.f32 0.0, %v764
    %v766 = vpop.f32.mrf.mxu0
    %v767 = vadd.f32 0.0, %v766
    %v768 = vpop.f32.mrf.mxu0
    %v769 = vpop.f32.mrf.mxu0
    %770 = vdwg.mxu0
    %771 = vmatprep.subr.bf16.mxu0 %v467
    %772 = vmatpush1.bf16.msra.mxu0 %v466
    %773 = vmatprep.subr.bf16.mxu0 %v463
    %774 = vmatpush1.bf16.msra.mxu0 %v462
    %775 = vmatprep.subr.bf16.mxu0 %v459
    %776 = vmatpush1.bf16.msra.mxu0 %v458
    %777 = vmatprep.subr.bf16.mxu0 %v455
    %778 = vmatpush1.bf16.msra.mxu0 %v454
    %779 = vmatprep.subr.bf16.mxu0 %v451
    %780 = vmatpush1.bf16.msra.mxu0 %v450
    %781 = vmatprep.subr.bf16.mxu0 %v447
    %782 = vmatpush1.bf16.msra.mxu0 %v446
    %783 = vmatprep.subr.bf16.mxu0 %v443
    %784 = vmatpush1.bf16.msra.mxu0 %v442
    %785 = vmatprep.subr.bf16.mxu0 %v439
    %786 = vmatpush1.bf16.msra.mxu0 %v438
    %787 = vmatprep.subr.bf16.mxu0 0
    %788 = vmatpush2.bf16.msra.mxu0 0
    %789 = vmatprep.subr.bf16.mxu0 0
    %790 = vmatpush2.bf16.msra.mxu0 0
    %791 = vmatprep.subr.bf16.mxu0 0
    %792 = vmatpush2.bf16.msra.mxu0 0
    %793 = vmatprep.subr.bf16.mxu0 0
    %794 = vmatpush2.bf16.msra.mxu0 0
    %795 = vmatprep.subr.bf16.mxu0 0
    %796 = vmatpush2.bf16.msra.mxu0 0
    %797 = vmatprep.subr.bf16.mxu0 0
    %798 = vmatpush2.bf16.msra.mxu0 0
    %799 = vmatprep.subr.bf16.mxu0 0
    %800 = vmatpush2.bf16.msra.mxu0 0
    %801 = vmatprep.subr.bf16.mxu0 0
    %802 = vmatpush2.bf16.msra.mxu0 0
    %803 = vmatprep.mubr.bf16.mxu0 0
    %804 = vmatmul.mubr.bf16.gmra.mxu0 %v729
    %v805 = vpop.f32.mrf.mxu0
    %v806 = vadd.f32 0.0, %v805
    %v807 = vpop.f32.mrf.mxu0
    %v808 = vadd.f32 0.0, %v807
    %v809 = vpop.f32.mrf.mxu0
    %v810 = vpop.f32.mrf.mxu0
    %811 = vdwg.mxu0
    %v812 = vadd.f32 %v725, %v765
    %v813 = vadd.f32 %v726, %v767
    %v814 = vadd.f32 %v727, %v806
    %v815 = vadd.f32 %v728, %v808
    %v816 = vxor.u32 %v812, 2147483648
    %v817 = vmul.f32 %v816, 1.442695
    %v818 = vpow.pop %v817
    %v819 = vadd.f32 %v818, 1.0
    %v820 = vrcp.pop %v819
    %v821 = vmul.f32 1.0, %v820
    %v822 = vxor.u32 %v813, 2147483648
    %v823 = vmul.f32 %v822, 1.442695
    %v824 = vpow.pop %v823
    %v825 = vadd.f32 %v824, 1.0
    %v826 = vrcp.pop %v825
    %v827 = vmul.f32 1.0, %v826
    %v828 = vtanh.pop %v814
    %v829 = vxor.u32 %v815, 2147483648
    %v830 = vmul.f32 %v829, 1.442695
    %v831 = vpow.pop %v830
    %v832 = vadd.f32 %v831, 1.0
    %v833 = vrcp.pop %v832
    %v834 = vmul.f32 1.0, %v833
    %v835 = vmul.f32 %v827, %v722
    %v836 = vmul.f32 %v821, %v828
    %v837 = vadd.f32 %v835, %v836
    %v838 = vtanh.pop %v837
    %v839 = vmul.f32 %v834, %v838
    %v840 = vld [vmem:[#allocation2 + $0x60] sm:$0xff]
    %v841 = vld [vmem:[#allocation2 + $0x68] sm:$0xff]
    %v842 = vld [vmem:[#allocation2 + $0x70] sm:$0xff]
    %v843 = vld [vmem:[#allocation2 + $0x78] sm:$0xff]
    %v844 = vpack.c.bf16 %v839, %v839
    %845 = vmatprep.subr.bf16.mxu0 %v465
    %846 = vmatpush1.bf16.msra.mxu0 %v464
    %847 = vmatprep.subr.bf16.mxu0 %v461
    %848 = vmatpush1.bf16.msra.mxu0 %v460
    %849 = vmatprep.subr.bf16.mxu0 %v457
    %850 = vmatpush1.bf16.msra.mxu0 %v456
    %851 = vmatprep.subr.bf16.mxu0 %v453
    %852 = vmatpush1.bf16.msra.mxu0 %v452
    %853 = vmatprep.subr.bf16.mxu0 %v449
    %854 = vmatpush1.bf16.msra.mxu0 %v448
    %855 = vmatprep.subr.bf16.mxu0 %v445
    %856 = vmatpush1.bf16.msra.mxu0 %v444
    %857 = vmatprep.subr.bf16.mxu0 %v441
    %858 = vmatpush1.bf16.msra.mxu0 %v440
    %859 = vmatprep.subr.bf16.mxu0 %v437
    %860 = vmatpush1.bf16.msra.mxu0 %v436
    %861 = vmatprep.subr.bf16.mxu0 0
    %862 = vmatpush2.bf16.msra.mxu0 0
    %863 = vmatprep.subr.bf16.mxu0 0
    %864 = vmatpush2.bf16.msra.mxu0 0
    %865 = vmatprep.subr.bf16.mxu0 0
    %866 = vmatpush2.bf16.msra.mxu0 0
    %867 = vmatprep.subr.bf16.mxu0 0
    %868 = vmatpush2.bf16.msra.mxu0 0
    %869 = vmatprep.subr.bf16.mxu0 0
    %870 = vmatpush2.bf16.msra.mxu0 0
    %871 = vmatprep.subr.bf16.mxu0 0
    %872 = vmatpush2.bf16.msra.mxu0 0
    %873 = vmatprep.subr.bf16.mxu0 0
    %874 = vmatpush2.bf16.msra.mxu0 0
    %875 = vmatprep.subr.bf16.mxu0 0
    %876 = vmatpush2.bf16.msra.mxu0 0
    %877 = vmatprep.mubr.bf16.mxu0 0
    %878 = vmatmul.mubr.bf16.gmra.mxu0 %v844
    %v879 = vpop.f32.mrf.mxu0
    %v880 = vadd.f32 0.0, %v879
    %v881 = vpop.f32.mrf.mxu0
    %v882 = vadd.f32 0.0, %v881
    %v883 = vpop.f32.mrf.mxu0
    %v884 = vpop.f32.mrf.mxu0
    %885 = vdwg.mxu0
    %886 = vmatprep.subr.bf16.mxu0 %v467
    %887 = vmatpush1.bf16.msra.mxu0 %v466
    %888 = vmatprep.subr.bf16.mxu0 %v463
    %889 = vmatpush1.bf16.msra.mxu0 %v462
    %890 = vmatprep.subr.bf16.mxu0 %v459
    %891 = vmatpush1.bf16.msra.mxu0 %v458
    %892 = vmatprep.subr.bf16.mxu0 %v455
    %893 = vmatpush1.bf16.msra.mxu0 %v454
    %894 = vmatprep.subr.bf16.mxu0 %v451
    %895 = vmatpush1.bf16.msra.mxu0 %v450
    %896 = vmatprep.subr.bf16.mxu0 %v447
    %897 = vmatpush1.bf16.msra.mxu0 %v446
    %898 = vmatprep.subr.bf16.mxu0 %v443
    %899 = vmatpush1.bf16.msra.mxu0 %v442
    %900 = vmatprep.subr.bf16.mxu0 %v439
    %901 = vmatpush1.bf16.msra.mxu0 %v438
    %902 = vmatprep.subr.bf16.mxu0 0
    %903 = vmatpush2.bf16.msra.mxu0 0
    %904 = vmatprep.subr.bf16.mxu0 0
    %905 = vmatpush2.bf16.msra.mxu0 0
    %906 = vmatprep.subr.bf16.mxu0 0
    %907 = vmatpush2.bf16.msra.mxu0 0
    %908 = vmatprep.subr.bf16.mxu0 0
    %909 = vmatpush2.bf16.msra.mxu0 0
    %910 = vmatprep.subr.bf16.mxu0 0
    %911 = vmatpush2.bf16.msra.mxu0 0
    %912 = vmatprep.subr.bf16.mxu0 0
    %913 = vmatpush2.bf16.msra.mxu0 0
    %914 = vmatprep.subr.bf16.mxu0 0
    %915 = vmatpush2.bf16.msra.mxu0 0
    %916 = vmatprep.subr.bf16.mxu0 0
    %917 = vmatpush2.bf16.msra.mxu0 0
    %918 = vmatprep.mubr.bf16.mxu0 0
    %919 = vmatmul.mubr.bf16.gmra.mxu0 %v844
    %v920 = vpop.f32.mrf.mxu0
    %v921 = vadd.f32 0.0, %v920
    %v922 = vpop.f32.mrf.mxu0
    %v923 = vadd.f32 0.0, %v922
    %v924 = vpop.f32.mrf.mxu0
    %v925 = vpop.f32.mrf.mxu0
    %926 = vdwg.mxu0
    %v927 = vadd.f32 %v840, %v880
    %v928 = vadd.f32 %v841, %v882
    %v929 = vadd.f32 %v842, %v921
    %v930 = vadd.f32 %v843, %v923
    %v931 = vxor.u32 %v927, 2147483648
    %v932 = vmul.f32 %v931, 1.442695
    %v933 = vpow.pop %v932
    %v934 = vadd.f32 %v933, 1.0
    %v935 = vrcp.pop %v934
    %v936 = vmul.f32 1.0, %v935
    %v937 = vxor.u32 %v928, 2147483648
    %v938 = vmul.f32 %v937, 1.442695
    %v939 = vpow.pop %v938
    %v940 = vadd.f32 %v939, 1.0
    %v941 = vrcp.pop %v940
    %v942 = vmul.f32 1.0, %v941
    %v943 = vtanh.pop %v929
    %v944 = vxor.u32 %v930, 2147483648
    %v945 = vmul.f32 %v944, 1.442695
    %v946 = vpow.pop %v945
    %v947 = vadd.f32 %v946, 1.0
    %v948 = vrcp.pop %v947
    %v949 = vmul.f32 1.0, %v948
    %v950 = vmul.f32 %v942, %v837
    %v951 = vmul.f32 %v936, %v943
    %v952 = vadd.f32 %v950, %v951
    %v953 = vtanh.pop %v952
    %v954 = vmul.f32 %v949, %v953
    %v955 = vld [vmem:[#allocation2 + $0x80] sm:$0xff]
    %v956 = vld [vmem:[#allocation2 + $0x88] sm:$0xff]
    %v957 = vld [vmem:[#allocation2 + $0x90] sm:$0xff]
    %v958 = vld [vmem:[#allocation2 + $0x98] sm:$0xff]
    %v959 = vpack.c.bf16 %v954, %v954
    %960 = vmatprep.subr.bf16.mxu0 %v465
    %961 = vmatpush1.bf16.msra.mxu0 %v464
    %962 = vmatprep.subr.bf16.mxu0 %v461
    %963 = vmatpush1.bf16.msra.mxu0 %v460
    %964 = vmatprep.subr.bf16.mxu0 %v457
    %965 = vmatpush1.bf16.msra.mxu0 %v456
    %966 = vmatprep.subr.bf16.mxu0 %v453
    %967 = vmatpush1.bf16.msra.mxu0 %v452
    %968 = vmatprep.subr.bf16.mxu0 %v449
    %969 = vmatpush1.bf16.msra.mxu0 %v448
    %970 = vmatprep.subr.bf16.mxu0 %v445
    %971 = vmatpush1.bf16.msra.mxu0 %v444
    %972 = vmatprep.subr.bf16.mxu0 %v441
    %973 = vmatpush1.bf16.msra.mxu0 %v440
    %974 = vmatprep.subr.bf16.mxu0 %v437
    %975 = vmatpush1.bf16.msra.mxu0 %v436
    %976 = vmatprep.subr.bf16.mxu0 0
    %977 = vmatpush2.bf16.msra.mxu0 0
    %978 = vmatprep.subr.bf16.mxu0 0
    %979 = vmatpush2.bf16.msra.mxu0 0
    %980 = vmatprep.subr.bf16.mxu0 0
    %981 = vmatpush2.bf16.msra.mxu0 0
    %982 = vmatprep.subr.bf16.mxu0 0
    %983 = vmatpush2.bf16.msra.mxu0 0
    %984 = vmatprep.subr.bf16.mxu0 0
    %985 = vmatpush2.bf16.msra.mxu0 0
    %986 = vmatprep.subr.bf16.mxu0 0
    %987 = vmatpush2.bf16.msra.mxu0 0
    %988 = vmatprep.subr.bf16.mxu0 0
    %989 = vmatpush2.bf16.msra.mxu0 0
    %990 = vmatprep.subr.bf16.mxu0 0
    %991 = vmatpush2.bf16.msra.mxu0 0
    %992 = vmatprep.mubr.bf16.mxu0 0
    %993 = vmatmul.mubr.bf16.gmra.mxu0 %v959
    %v994 = vpop.f32.mrf.mxu0
    %v995 = vadd.f32 0.0, %v994
    %v996 = vpop.f32.mrf.mxu0
    %v997 = vadd.f32 0.0, %v996
    %v998 = vpop.f32.mrf.mxu0
    %v999 = vpop.f32.mrf.mxu0
    %1000 = vdwg.mxu0
    %1001 = vmatprep.subr.bf16.mxu0 %v467
    %1002 = vmatpush1.bf16.msra.mxu0 %v466
    %1003 = vmatprep.subr.bf16.mxu0 %v463
    %1004 = vmatpush1.bf16.msra.mxu0 %v462
    %1005 = vmatprep.subr.bf16.mxu0 %v459
    %1006 = vmatpush1.bf16.msra.mxu0 %v458
    %1007 = vmatprep.subr.bf16.mxu0 %v455
    %1008 = vmatpush1.bf16.msra.mxu0 %v454
    %1009 = vmatprep.subr.bf16.mxu0 %v451
    %1010 = vmatpush1.bf16.msra.mxu0 %v450
    %1011 = vmatprep.subr.bf16.mxu0 %v447
    %1012 = vmatpush1.bf16.msra.mxu0 %v446
    %1013 = vmatprep.subr.bf16.mxu0 %v443
    %1014 = vmatpush1.bf16.msra.mxu0 %v442
    %1015 = vmatprep.subr.bf16.mxu0 %v439
    %1016 = vmatpush1.bf16.msra.mxu0 %v438
    %1017 = vmatprep.subr.bf16.mxu0 0
    %1018 = vmatpush2.bf16.msra.mxu0 0
    %1019 = vmatprep.subr.bf16.mxu0 0
    %1020 = vmatpush2.bf16.msra.mxu0 0
    %1021 = vmatprep.subr.bf16.mxu0 0
    %1022 = vmatpush2.bf16.msra.mxu0 0
    %1023 = vmatprep.subr.bf16.mxu0 0
    %1024 = vmatpush2.bf16.msra.mxu0 0
    %1025 = vmatprep.subr.bf16.mxu0 0
    %1026 = vmatpush2.bf16.msra.mxu0 0
    %1027 = vmatprep.subr.bf16.mxu0 0
    %1028 = vmatpush2.bf16.msra.mxu0 0
    %1029 = vmatprep.subr.bf16.mxu0 0
    %1030 = vmatpush2.bf16.msra.mxu0 0
    %1031 = vmatprep.subr.bf16.mxu0 0
    %1032 = vmatpush2.bf16.msra.mxu0 0
    %1033 = vmatprep.mubr.bf16.mxu0 0
    %1034 = vmatmul.mubr.bf16.gmra.mxu0 %v959
    %v1035 = vpop.f32.mrf.mxu0
    %v1036 = vadd.f32 0.0, %v1035
    %v1037 = vpop.f32.mrf.mxu0
    %v1038 = vadd.f32 0.0, %v1037
    %v1039 = vpop.f32.mrf.mxu0
    %v1040 = vpop.f32.mrf.mxu0
    %1041 = vdwg.mxu0
    %v1042 = vadd.f32 %v955, %v995
    %v1043 = vadd.f32 %v956, %v997
    %v1044 = vadd.f32 %v957, %v1036
    %v1045 = vadd.f32 %v958, %v1038
    %v1046 = vxor.u32 %v1042, 2147483648
    %v1047 = vmul.f32 %v1046, 1.442695
    %v1048 = vpow.pop %v1047
    %v1049 = vadd.f32 %v1048, 1.0
    %v1050 = vrcp.pop %v1049
    %v1051 = vmul.f32 1.0, %v1050
    %v1052 = vxor.u32 %v1043, 2147483648
    %v1053 = vmul.f32 %v1052, 1.442695
    %v1054 = vpow.pop %v1053
    %v1055 = vadd.f32 %v1054, 1.0
    %v1056 = vrcp.pop %v1055
    %v1057 = vmul.f32 1.0, %v1056
    %v1058 = vtanh.pop %v1044
    %v1059 = vxor.u32 %v1045, 2147483648
    %v1060 = vmul.f32 %v1059, 1.442695
    %v1061 = vpow.pop %v1060
    %v1062 = vadd.f32 %v1061, 1.0
    %v1063 = vrcp.pop %v1062
    %v1064 = vmul.f32 1.0, %v1063
    %v1065 = vmul.f32 %v1057, %v952
    %v1066 = vmul.f32 %v1051, %v1058
    %v1067 = vadd.f32 %v1065, %v1066
    %v1068 = vtanh.pop %v1067
    %v1069 = vmul.f32 %v1064, %v1068
    %v1070 = vld [vmem:[#allocation2 + $0xa0] sm:$0xff]
    %v1071 = vld [vmem:[#allocation2 + $0xa8] sm:$0xff]
    %v1072 = vld [vmem:[#allocation2 + $0xb0] sm:$0xff]
    %v1073 = vld [vmem:[#allocation2 + $0xb8] sm:$0xff]
    %v1074 = vpack.c.bf16 %v1069, %v1069
    %1075 = vmatprep.subr.bf16.mxu0 %v465
    %1076 = vmatpush1.bf16.msra.mxu0 %v464
    %1077 = vmatprep.subr.bf16.mxu0 %v461
    %1078 = vmatpush1.bf16.msra.mxu0 %v460
    %1079 = vmatprep.subr.bf16.mxu0 %v457
    %1080 = vmatpush1.bf16.msra.mxu0 %v456
    %1081 = vmatprep.subr.bf16.mxu0 %v453
    %1082 = vmatpush1.bf16.msra.mxu0 %v452
    %1083 = vmatprep.subr.bf16.mxu0 %v449
    %1084 = vmatpush1.bf16.msra.mxu0 %v448
    %1085 = vmatprep.subr.bf16.mxu0 %v445
    %1086 = vmatpush1.bf16.msra.mxu0 %v444
    %1087 = vmatprep.subr.bf16.mxu0 %v441
    %1088 = vmatpush1.bf16.msra.mxu0 %v440
    %1089 = vmatprep.subr.bf16.mxu0 %v437
    %1090 = vmatpush1.bf16.msra.mxu0 %v436
    %1091 = vmatprep.subr.bf16.mxu0 0
    %1092 = vmatpush2.bf16.msra.mxu0 0
    %1093 = vmatprep.subr.bf16.mxu0 0
    %1094 = vmatpush2.bf16.msra.mxu0 0
    %1095 = vmatprep.subr.bf16.mxu0 0
    %1096 = vmatpush2.bf16.msra.mxu0 0
    %1097 = vmatprep.subr.bf16.mxu0 0
    %1098 = vmatpush2.bf16.msra.mxu0 0
    %1099 = vmatprep.subr.bf16.mxu0 0
    %1100 = vmatpush2.bf16.msra.mxu0 0
    %1101 = vmatprep.subr.bf16.mxu0 0
    %1102 = vmatpush2.bf16.msra.mxu0 0
    %1103 = vmatprep.subr.bf16.mxu0 0
    %1104 = vmatpush2.bf16.msra.mxu0 0
    %1105 = vmatprep.subr.bf16.mxu0 0
    %1106 = vmatpush2.bf16.msra.mxu0 0
    %1107 = vmatprep.mubr.bf16.mxu0 0
    %1108 = vmatmul.mubr.bf16.gmra.mxu0 %v1074
    %v1109 = vpop.f32.mrf.mxu0
    %v1110 = vadd.f32 0.0, %v1109
    %v1111 = vpop.f32.mrf.mxu0
    %v1112 = vadd.f32 0.0, %v1111
    %v1113 = vpop.f32.mrf.mxu0
    %v1114 = vpop.f32.mrf.mxu0
    %1115 = vdwg.mxu0
    %1116 = vmatprep.subr.bf16.mxu0 %v467
    %1117 = vmatpush1.bf16.msra.mxu0 %v466
    %1118 = vmatprep.subr.bf16.mxu0 %v463
    %1119 = vmatpush1.bf16.msra.mxu0 %v462
    %1120 = vmatprep.subr.bf16.mxu0 %v459
    %1121 = vmatpush1.bf16.msra.mxu0 %v458
    %1122 = vmatprep.subr.bf16.mxu0 %v455
    %1123 = vmatpush1.bf16.msra.mxu0 %v454
    %1124 = vmatprep.subr.bf16.mxu0 %v451
    %1125 = vmatpush1.bf16.msra.mxu0 %v450
    %1126 = vmatprep.subr.bf16.mxu0 %v447
    %1127 = vmatpush1.bf16.msra.mxu0 %v446
    %1128 = vmatprep.subr.bf16.mxu0 %v443
    %1129 = vmatpush1.bf16.msra.mxu0 %v442
    %1130 = vmatprep.subr.bf16.mxu0 %v439
    %1131 = vmatpush1.bf16.msra.mxu0 %v438
    %1132 = vmatprep.subr.bf16.mxu0 0
    %1133 = vmatpush2.bf16.msra.mxu0 0
    %1134 = vmatprep.subr.bf16.mxu0 0
    %1135 = vmatpush2.bf16.msra.mxu0 0
    %1136 = vmatprep.subr.bf16.mxu0 0
    %1137 = vmatpush2.bf16.msra.mxu0 0
    %1138 = vmatprep.subr.bf16.mxu0 0
    %1139 = vmatpush2.bf16.msra.mxu0 0
    %1140 = vmatprep.subr.bf16.mxu0 0
    %1141 = vmatpush2.bf16.msra.mxu0 0
    %1142 = vmatprep.subr.bf16.mxu0 0
    %1143 = vmatpush2.bf16.msra.mxu0 0
    %1144 = vmatprep.subr.bf16.mxu0 0
    %1145 = vmatpush2.bf16.msra.mxu0 0
    %1146 = vmatprep.subr.bf16.mxu0 0
    %1147 = vmatpush2.bf16.msra.mxu0 0
    %1148 = vmatprep.mubr.bf16.mxu0 0
    %1149 = vmatmul.mubr.bf16.gmra.mxu0 %v1074
    %v1150 = vpop.f32.mrf.mxu0
    %v1151 = vadd.f32 0.0, %v1150
    %v1152 = vpop.f32.mrf.mxu0
    %v1153 = vadd.f32 0.0, %v1152
    %v1154 = vpop.f32.mrf.mxu0
    %v1155 = vpop.f32.mrf.mxu0
    %1156 = vdwg.mxu0
    %v1157 = vadd.f32 %v1070, %v1110
    %v1158 = vadd.f32 %v1071, %v1112
    %v1159 = vadd.f32 %v1072, %v1151
    %v1160 = vadd.f32 %v1073, %v1153
    %v1161 = vxor.u32 %v1157, 2147483648
    %v1162 = vmul.f32 %v1161, 1.442695
    %v1163 = vpow.pop %v1162
    %v1164 = vadd.f32 %v1163, 1.0
    %v1165 = vrcp.pop %v1164
    %v1166 = vmul.f32 1.0, %v1165
    %v1167 = vxor.u32 %v1158, 2147483648
    %v1168 = vmul.f32 %v1167, 1.442695
    %v1169 = vpow.pop %v1168
    %v1170 = vadd.f32 %v1169, 1.0
    %v1171 = vrcp.pop %v1170
    %v1172 = vmul.f32 1.0, %v1171
    %v1173 = vtanh.pop %v1159
    %v1174 = vxor.u32 %v1160, 2147483648
    %v1175 = vmul.f32 %v1174, 1.442695
    %v1176 = vpow.pop %v1175
    %v1177 = vadd.f32 %v1176, 1.0
    %v1178 = vrcp.pop %v1177
    %v1179 = vmul.f32 1.0, %v1178
    %v1180 = vmul.f32 %v1172, %v1067
    %v1181 = vmul.f32 %v1166, %v1173
    %v1182 = vadd.f32 %v1180, %v1181
    %v1183 = vtanh.pop %v1182
    %v1184 = vmul.f32 %v1179, %v1183
    %v1185 = vld [vmem:[#allocation2 + $0xc0] sm:$0xff]
    %v1186 = vld [vmem:[#allocation2 + $0xc8] sm:$0xff]
    %v1187 = vld [vmem:[#allocation2 + $0xd0] sm:$0xff]
    %v1188 = vld [vmem:[#allocation2 + $0xd8] sm:$0xff]
    %v1189 = vpack.c.bf16 %v1184, %v1184
    %1190 = vmatprep.subr.bf16.mxu0 %v465
    %1191 = vmatpush1.bf16.msra.mxu0 %v464
    %1192 = vmatprep.subr.bf16.mxu0 %v461
    %1193 = vmatpush1.bf16.msra.mxu0 %v460
    %1194 = vmatprep.subr.bf16.mxu0 %v457
    %1195 = vmatpush1.bf16.msra.mxu0 %v456
    %1196 = vmatprep.subr.bf16.mxu0 %v453
    %1197 = vmatpush1.bf16.msra.mxu0 %v452
    %1198 = vmatprep.subr.bf16.mxu0 %v449
    %1199 = vmatpush1.bf16.msra.mxu0 %v448
    %1200 = vmatprep.subr.bf16.mxu0 %v445
    %1201 = vmatpush1.bf16.msra.mxu0 %v444
    %1202 = vmatprep.subr.bf16.mxu0 %v441
    %1203 = vmatpush1.bf16.msra.mxu0 %v440
    %1204 = vmatprep.subr.bf16.mxu0 %v437
    %1205 = vmatpush1.bf16.msra.mxu0 %v436
    %1206 = vmatprep.subr.bf16.mxu0 0
    %1207 = vmatpush2.bf16.msra.mxu0 0
    %1208 = vmatprep.subr.bf16.mxu0 0
    %1209 = vmatpush2.bf16.msra.mxu0 0
    %1210 = vmatprep.subr.bf16.mxu0 0
    %1211 = vmatpush2.bf16.msra.mxu0 0
    %1212 = vmatprep.subr.bf16.mxu0 0
    %1213 = vmatpush2.bf16.msra.mxu0 0
    %1214 = vmatprep.subr.bf16.mxu0 0
    %1215 = vmatpush2.bf16.msra.mxu0 0
    %1216 = vmatprep.subr.bf16.mxu0 0
    %1217 = vmatpush2.bf16.msra.mxu0 0
    %1218 = vmatprep.subr.bf16.mxu0 0
    %1219 = vmatpush2.bf16.msra.mxu0 0
    %1220 = vmatprep.subr.bf16.mxu0 0
    %1221 = vmatpush2.bf16.msra.mxu0 0
    %1222 = vmatprep.mubr.bf16.mxu0 0
    %1223 = vmatmul.mubr.bf16.gmra.mxu0 %v1189
    %v1224 = vpop.f32.mrf.mxu0
    %v1225 = vadd.f32 0.0, %v1224
    %v1226 = vpop.f32.mrf.mxu0
    %v1227 = vadd.f32 0.0, %v1226
    %v1228 = vpop.f32.mrf.mxu0
    %v1229 = vpop.f32.mrf.mxu0
    %1230 = vdwg.mxu0
    %1231 = vmatprep.subr.bf16.mxu0 %v467
    %1232 = vmatpush1.bf16.msra.mxu0 %v466
    %1233 = vmatprep.subr.bf16.mxu0 %v463
    %1234 = vmatpush1.bf16.msra.mxu0 %v462
    %1235 = vmatprep.subr.bf16.mxu0 %v459
    %1236 = vmatpush1.bf16.msra.mxu0 %v458
    %1237 = vmatprep.subr.bf16.mxu0 %v455
    %1238 = vmatpush1.bf16.msra.mxu0 %v454
    %1239 = vmatprep.subr.bf16.mxu0 %v451
    %1240 = vmatpush1.bf16.msra.mxu0 %v450
    %1241 = vmatprep.subr.bf16.mxu0 %v447
    %1242 = vmatpush1.bf16.msra.mxu0 %v446
    %1243 = vmatprep.subr.bf16.mxu0 %v443
    %1244 = vmatpush1.bf16.msra.mxu0 %v442
    %1245 = vmatprep.subr.bf16.mxu0 %v439
    %1246 = vmatpush1.bf16.msra.mxu0 %v438
    %1247 = vmatprep.subr.bf16.mxu0 0
    %1248 = vmatpush2.bf16.msra.mxu0 0
    %1249 = vmatprep.subr.bf16.mxu0 0
    %1250 = vmatpush2.bf16.msra.mxu0 0
    %1251 = vmatprep.subr.bf16.mxu0 0
    %1252 = vmatpush2.bf16.msra.mxu0 0
    %1253 = vmatprep.subr.bf16.mxu0 0
    %1254 = vmatpush2.bf16.msra.mxu0 0
    %1255 = vmatprep.subr.bf16.mxu0 0
    %1256 = vmatpush2.bf16.msra.mxu0 0
    %1257 = vmatprep.subr.bf16.mxu0 0
    %1258 = vmatpush2.bf16.msra.mxu0 0
    %1259 = vmatprep.subr.bf16.mxu0 0
    %1260 = vmatpush2.bf16.msra.mxu0 0
    %1261 = vmatprep.subr.bf16.mxu0 0
    %1262 = vmatpush2.bf16.msra.mxu0 0
    %1263 = vmatprep.mubr.bf16.mxu0 0
    %1264 = vmatmul.mubr.bf16.gmra.mxu0 %v1189
    %v1265 = vpop.f32.mrf.mxu0
    %v1266 = vadd.f32 0.0, %v1265
    %v1267 = vpop.f32.mrf.mxu0
    %v1268 = vadd.f32 0.0, %v1267
    %v1269 = vpop.f32.mrf.mxu0
    %v1270 = vpop.f32.mrf.mxu0
    %1271 = vdwg.mxu0
    %v1272 = vadd.f32 %v1185, %v1225
    %v1273 = vadd.f32 %v1186, %v1227
    %v1274 = vadd.f32 %v1187, %v1266
    %v1275 = vadd.f32 %v1188, %v1268
    %v1276 = vxor.u32 %v1272, 2147483648
    %v1277 = vmul.f32 %v1276, 1.442695
    %v1278 = vpow.pop %v1277
    %v1279 = vadd.f32 %v1278, 1.0
    %v1280 = vrcp.pop %v1279
    %v1281 = vmul.f32 1.0, %v1280
    %v1282 = vxor.u32 %v1273, 2147483648
    %v1283 = vmul.f32 %v1282, 1.442695
    %v1284 = vpow.pop %v1283
    %v1285 = vadd.f32 %v1284, 1.0
    %v1286 = vrcp.pop %v1285
    %v1287 = vmul.f32 1.0, %v1286
    %v1288 = vtanh.pop %v1274
    %v1289 = vxor.u32 %v1275, 2147483648
    %v1290 = vmul.f32 %v1289, 1.442695
    %v1291 = vpow.pop %v1290
    %v1292 = vadd.f32 %v1291, 1.0
    %v1293 = vrcp.pop %v1292
    %v1294 = vmul.f32 1.0, %v1293
    %v1295 = vmul.f32 %v1287, %v1182
    %v1296 = vmul.f32 %v1281, %v1288
    %v1297 = vadd.f32 %v1295, %v1296
    %v1298 = vtanh.pop %v1297
    %v1299 = vmul.f32 %v1294, %v1298
    %v1300 = vld [vmem:[#allocation2 + $0xe0] sm:$0xff]
    %v1301 = vld [vmem:[#allocation2 + $0xe8] sm:$0xff]
    %v1302 = vld [vmem:[#allocation2 + $0xf0] sm:$0xff]
    %v1303 = vld [vmem:[#allocation2 + $0xf8] sm:$0xff]
    %v1304 = vpack.c.bf16 %v1299, %v1299
    %1305 = vmatprep.subr.bf16.mxu0 %v465
    %1306 = vmatpush1.bf16.msra.mxu0 %v464
    %1307 = vmatprep.subr.bf16.mxu0 %v461
    %1308 = vmatpush1.bf16.msra.mxu0 %v460
    %1309 = vmatprep.subr.bf16.mxu0 %v457
    %1310 = vmatpush1.bf16.msra.mxu0 %v456
    %1311 = vmatprep.subr.bf16.mxu0 %v453
    %1312 = vmatpush1.bf16.msra.mxu0 %v452
    %1313 = vmatprep.subr.bf16.mxu0 %v449
    %1314 = vmatpush1.bf16.msra.mxu0 %v448
    %1315 = vmatprep.subr.bf16.mxu0 %v445
    %1316 = vmatpush1.bf16.msra.mxu0 %v444
    %1317 = vmatprep.subr.bf16.mxu0 %v441
    %1318 = vmatpush1.bf16.msra.mxu0 %v440
    %1319 = vmatprep.subr.bf16.mxu0 %v437
    %1320 = vmatpush1.bf16.msra.mxu0 %v436
    %1321 = vmatprep.subr.bf16.mxu0 0
    %1322 = vmatpush2.bf16.msra.mxu0 0
    %1323 = vmatprep.subr.bf16.mxu0 0
    %1324 = vmatpush2.bf16.msra.mxu0 0
    %1325 = vmatprep.subr.bf16.mxu0 0
    %1326 = vmatpush2.bf16.msra.mxu0 0
    %1327 = vmatprep.subr.bf16.mxu0 0
    %1328 = vmatpush2.bf16.msra.mxu0 0
    %1329 = vmatprep.subr.bf16.mxu0 0
    %1330 = vmatpush2.bf16.msra.mxu0 0
    %1331 = vmatprep.subr.bf16.mxu0 0
    %1332 = vmatpush2.bf16.msra.mxu0 0
    %1333 = vmatprep.subr.bf16.mxu0 0
    %1334 = vmatpush2.bf16.msra.mxu0 0
    %1335 = vmatprep.subr.bf16.mxu0 0
    %1336 = vmatpush2.bf16.msra.mxu0 0
    %1337 = vmatprep.mubr.bf16.mxu0 0
    %1338 = vmatmul.mubr.bf16.gmra.mxu0 %v1304
    %v1339 = vpop.f32.mrf.mxu0
    %v1340 = vadd.f32 0.0, %v1339
    %v1341 = vpop.f32.mrf.mxu0
    %v1342 = vadd.f32 0.0, %v1341
    %v1343 = vpop.f32.mrf.mxu0
    %v1344 = vpop.f32.mrf.mxu0
    %1345 = vdwg.mxu0
    %1346 = vmatprep.subr.bf16.mxu0 %v467
    %1347 = vmatpush1.bf16.msra.mxu0 %v466
    %1348 = vmatprep.subr.bf16.mxu0 %v463
    %1349 = vmatpush1.bf16.msra.mxu0 %v462
    %1350 = vmatprep.subr.bf16.mxu0 %v459
    %1351 = vmatpush1.bf16.msra.mxu0 %v458
    %1352 = vmatprep.subr.bf16.mxu0 %v455
    %1353 = vmatpush1.bf16.msra.mxu0 %v454
    %1354 = vmatprep.subr.bf16.mxu0 %v451
    %1355 = vmatpush1.bf16.msra.mxu0 %v450
    %1356 = vmatprep.subr.bf16.mxu0 %v447
    %1357 = vmatpush1.bf16.msra.mxu0 %v446
    %1358 = vmatprep.subr.bf16.mxu0 %v443
    %1359 = vmatpush1.bf16.msra.mxu0 %v442
    %1360 = vmatprep.subr.bf16.mxu0 %v439
    %1361 = vmatpush1.bf16.msra.mxu0 %v438
    %1362 = vmatprep.subr.bf16.mxu0 0
    %1363 = vmatpush2.bf16.msra.mxu0 0
    %1364 = vmatprep.subr.bf16.mxu0 0
    %1365 = vmatpush2.bf16.msra.mxu0 0
    %1366 = vmatprep.subr.bf16.mxu0 0
    %1367 = vmatpush2.bf16.msra.mxu0 0
    %1368 = vmatprep.subr.bf16.mxu0 0
    %1369 = vmatpush2.bf16.msra.mxu0 0
    %1370 = vmatprep.subr.bf16.mxu0 0
    %1371 = vmatpush2.bf16.msra.mxu0 0
    %1372 = vmatprep.subr.bf16.mxu0 0
    %1373 = vmatpush2.bf16.msra.mxu0 0
    %1374 = vmatprep.subr.bf16.mxu0 0
    %1375 = vmatpush2.bf16.msra.mxu0 0
    %1376 = vmatprep.subr.bf16.mxu0 0
    %1377 = vmatpush2.bf16.msra.mxu0 0
    %1378 = vmatprep.mubr.bf16.mxu0 0
    %1379 = vmatmul.mubr.bf16.gmra.mxu0 %v1304
    %v1380 = vpop.f32.mrf.mxu0
    %v1381 = vadd.f32 0.0, %v1380
    %v1382 = vpop.f32.mrf.mxu0
    %v1383 = vadd.f32 0.0, %v1382
    %v1384 = vpop.f32.mrf.mxu0
    %v1385 = vpop.f32.mrf.mxu0
    %1386 = vdwg.mxu0
    %v1387 = vadd.f32 %v1300, %v1340
    %v1388 = vadd.f32 %v1301, %v1342
    %v1389 = vadd.f32 %v1302, %v1381
    %v1390 = vadd.f32 %v1303, %v1383
    %v1391 = vxor.u32 %v1387, 2147483648
    %v1392 = vmul.f32 %v1391, 1.442695
    %v1393 = vpow.pop %v1392
    %v1394 = vadd.f32 %v1393, 1.0
    %v1395 = vrcp.pop %v1394
    %v1396 = vmul.f32 1.0, %v1395
    %v1397 = vxor.u32 %v1388, 2147483648
    %v1398 = vmul.f32 %v1397, 1.442695
    %v1399 = vpow.pop %v1398
    %v1400 = vadd.f32 %v1399, 1.0
    %v1401 = vrcp.pop %v1400
    %v1402 = vmul.f32 1.0, %v1401
    %v1403 = vtanh.pop %v1389
    %v1404 = vxor.u32 %v1390, 2147483648
    %v1405 = vmul.f32 %v1404, 1.442695
    %v1406 = vpow.pop %v1405
    %v1407 = vadd.f32 %v1406, 1.0
    %v1408 = vrcp.pop %v1407
    %v1409 = vmul.f32 1.0, %v1408
    %v1410 = vmul.f32 %v1402, %v1297
    %v1411 = vmul.f32 %v1396, %v1403
    %v1412 = vadd.f32 %v1410, %v1411
    %v1413 = vtanh.pop %v1412
    %v1414 = vmul.f32 %v1409, %v1413
    %v1415 = vld [vmem:[%s4] sm:$0xff]
    %v1416 = vld [vmem:[%s4 + $0x8] sm:$0xff]
    %v1417 = vld [vmem:[%s4 + $0x10] sm:$0xff]
    %v1418 = vld [vmem:[%s4 + $0x18] sm:$0xff]
    %v1419 = vld [vmem:[%s4 + $0x20] sm:$0xff]
    %v1420 = vld [vmem:[%s4 + $0x28] sm:$0xff]
    %v1421 = vld [vmem:[%s4 + $0x30] sm:$0xff]
    %v1422 = vld [vmem:[%s4 + $0x38] sm:$0xff]
    %v1423 = vld [vmem:[%s4 + $0x40] sm:$0xff]
    %v1424 = vld [vmem:[%s4 + $0x48] sm:$0xff]
    %v1425 = vld [vmem:[%s4 + $0x50] sm:$0xff]
    %v1426 = vld [vmem:[%s4 + $0x58] sm:$0xff]
    %v1427 = vld [vmem:[%s4 + $0x60] sm:$0xff]
    %v1428 = vld [vmem:[%s4 + $0x68] sm:$0xff]
    %v1429 = vld [vmem:[%s4 + $0x70] sm:$0xff]
    %v1430 = vld [vmem:[%s4 + $0x78] sm:$0xff]
    %v1431 = vld [vmem:[%s5] sm:$0x1]
    %v1433 = vlaneseq
    %v1434 = vshrl.u32 %v1433, 7
    %v1435 = vsub.s32 0, %v1434
    %v1436 = vrot.slane %v1431, %v1435
    %1438 = vmatprep.subr.mxu0 0.0
    %1439 = vmatpush1.msra.mxu0 %v1430
    %1440 = vmatprep.subr.mxu0 0.0
    %1441 = vmatpush1.msra.mxu0 %v1429
    %1442 = vmatprep.subr.mxu0 0.0
    %1443 = vmatpush1.msra.mxu0 %v1428
    %1444 = vmatprep.subr.mxu0 0.0
    %1445 = vmatpush1.msra.mxu0 %v1427
    %1446 = vmatprep.subr.mxu0 0.0
    %1447 = vmatpush1.msra.mxu0 %v1426
    %1448 = vmatprep.subr.mxu0 0.0
    %1449 = vmatpush1.msra.mxu0 %v1425
    %1450 = vmatprep.subr.mxu0 0.0
    %1451 = vmatpush1.msra.mxu0 %v1424
    %1452 = vmatprep.subr.mxu0 0.0
    %1453 = vmatpush1.msra.mxu0 %v1423
    %1454 = vmatprep.subr.mxu0 0.0
    %1455 = vmatpush1.msra.mxu0 %v1422
    %1456 = vmatprep.subr.mxu0 0.0
    %1457 = vmatpush1.msra.mxu0 %v1421
    %1458 = vmatprep.subr.mxu0 0.0
    %1459 = vmatpush1.msra.mxu0 %v1420
    %1460 = vmatprep.subr.mxu0 0.0
    %1461 = vmatpush1.msra.mxu0 %v1419
    %1462 = vmatprep.subr.mxu0 0.0
    %1463 = vmatpush1.msra.mxu0 %v1418
    %1464 = vmatprep.subr.mxu0 0.0
    %1465 = vmatpush1.msra.mxu0 %v1417
    %1466 = vmatprep.subr.mxu0 0.0
    %1467 = vmatpush1.msra.mxu0 %v1416
    %1468 = vmatprep.subr.mxu0 0.0
    %1469 = vmatpush1.msra.mxu0 %v1415
    %1470 = vmatprep.subr.mxu0 0.0
    %1471 = vmatpush2.msra.mxu0 0.0
    %1472 = vmatprep.subr.mxu0 0.0
    %1473 = vmatpush2.msra.mxu0 0.0
    %1474 = vmatprep.subr.mxu0 0.0
    %1475 = vmatpush2.msra.mxu0 0.0
    %1476 = vmatprep.subr.mxu0 0.0
    %1477 = vmatpush2.msra.mxu0 0.0
    %1478 = vmatprep.subr.mxu0 0.0
    %1479 = vmatpush2.msra.mxu0 0.0
    %1480 = vmatprep.subr.mxu0 0.0
    %1481 = vmatpush2.msra.mxu0 0.0
    %1482 = vmatprep.subr.mxu0 0.0
    %1483 = vmatpush2.msra.mxu0 0.0
    %1484 = vmatprep.subr.mxu0 0.0
    %1485 = vmatpush2.msra.mxu0 0.0
    %1486 = vmatprep.subr.mxu0 0.0
    %1487 = vmatpush2.msra.mxu0 0.0
    %1488 = vmatprep.subr.mxu0 0.0
    %1489 = vmatpush2.msra.mxu0 0.0
    %1490 = vmatprep.subr.mxu0 0.0
    %1491 = vmatpush2.msra.mxu0 0.0
    %1492 = vmatprep.subr.mxu0 0.0
    %1493 = vmatpush2.msra.mxu0 0.0
    %1494 = vmatprep.subr.mxu0 0.0
    %1495 = vmatpush2.msra.mxu0 0.0
    %1496 = vmatprep.subr.mxu0 0.0
    %1497 = vmatpush2.msra.mxu0 0.0
    %1498 = vmatprep.subr.mxu0 0.0
    %1499 = vmatpush2.msra.mxu0 0.0
    %1500 = vmatprep.subr.mxu0 0.0
    %1501 = vmatpush2.msra.mxu0 0.0
    %1502 = vmatprep.mubr.f32.mxu0 0.0
    %1503 = vmatmul.mubr.f32.gmra.mxu0 %v1414
    %v1504 = vpop.f32.mrf.mxu0
    %v1505 = vadd.f32 %v1436, %v1504
    %v1506 = vpop.f32.mrf.mxu0
    %1507 = vdwg.mxu0
    %vm1508 = vcmask 9216
    %1509 = vst.msk [vmem:[#allocation6] sm:$0x3] %vm1508, %v1505
    // Predicated region
    $region30: #{tpu_custom_call.1} parent=1 // pred_check
      _
    $region31: #{tpu_custom_call.1} parent=1 // pred_check_branch
      %1511 = sbr.rel (0) target = $region33
    $region32: #{tpu_custom_call.1} parent=1 // pred_region
      %s1513 = ssub.s32 32, 32
      %1514 = vsyncadd [#allocation5], %s1513
      %s1516 = sshll.u32 [#allocation6], 4
      %s1517 = int_to_ptr.vmem [resolvable:$true] %s1516
      %1519 = dma.vmem_to_hbm [thread:$0]  %s1517, 32, %s6, [#allocation5]
    $region33: #{tpu_custom_call.1} parent=1 // pred_fallthru
      _
    // Predicated region
    $region34: #{tpu_custom_call.1} parent=1 // pred_check
      _
    $region35: #{tpu_custom_call.1} parent=1 // pred_check_branch
      %1521 = sbr.rel (0) target = $region37
    $region36: #{tpu_custom_call.1} parent=1 // pred_region
      %1522 = dma.done [#allocation5], 32
    $region37: #{tpu_custom_call.1} parent=1 // pred_fallthru
      _
    %1523 = vsyncpa [#allocation4], 1
    %1524 = vsyncpa [#allocation5], 1

</llo_original>
